<compile_context>
chip_gen: v7x
topology: tpu7x:2x2x1
jax: 0.10.0
libtpu: 0.0.40
codegen_flags: <defaults>
</compile_context>

<pallas_src>
import jax
import jax.numpy as jnp
from jax.experimental import pallas as pl
from jax.experimental.pallas import tpu as pltpu

# ----------------------------- problem sizes --------------------------------
P = 8            # number of probe groups (len(d))
G = 8            # number of gallery nodes (len(w)); power of two (used for bitwise block mask)
D = 512          # feature dim (fixed by ReFineBlock / classifier: 512)
C_OUT = 2        # classifier class_num
PAD_OUT = 128    # lane-padded classifier output width (unmasked stores)
BN_EPS = 1e-5
RATIO = 0.9
NEG_INF = -1e30  # finite "minus infinity" for masked softmax logits

assert G & (G - 1) == 0, "block mask below assumes G is a power of two"


# ------------------------------ Pallas kernel -------------------------------
def sggnn_kernel(d_ref, wtb_ref, w1_ref, b1_ref, w2_ref, b2_ref,
                 wc_ref, bc_ref, out_ref):
    d = d_ref[...]                      # (M, D),  M = P*G

    # --- ReFineBlock (eval): 2 x [Linear (BN folded in) + LeakyReLU(0.1)] ---
    h = jnp.dot(d, w1_ref[...], preferred_element_type=jnp.float32) + b1_ref[...]
    h = jnp.maximum(h, 0.1 * h)         # LeakyReLU(0.1); Dropout(0.5) -> identity in eval
    h = jnp.dot(h, w2_ref[...], preferred_element_type=jnp.float32) + b2_ref[...]
    t = jnp.maximum(h, 0.1 * h)         # (M, D)

    # --- block-diagonal normalized adjacency: kron(I_P, w_norm^T) -----------
    # torch: w_norm = softmax(w - 100*diag(diag(w)), dim=0)
    # wtb[i, j] = w[j % G, i % G]  (host-tiled w^T).  Restricting each row's softmax to its
    # own diagonal GxG block yields a_blk[i, j] = w_norm[j % G, i % G] inside the block and
    # exactly 0 outside it, so one MXU push does all P per-probe propagations.
    wtb = wtb_ref[...]                  # (M, M)
    m = wtb.shape[0]
    rows = jax.lax.broadcasted_iota(jnp.int32, (m, m), 0)
    cols = jax.lax.broadcasted_iota(jnp.int32, (m, m), 1)
    # true diagonal of w (within-block diag == global diag): apply the -100*diag term
    logits = jnp.where(rows == cols, -99.0 * wtb, wtb)
    # same-block mask without integer division: i//G == j//G  <=>  (i - i&(G-1)) == (j - j&(G-1))
    in_block = (rows - (rows & (G - 1))) == (cols - (cols & (G - 1)))
    logits = jnp.where(in_block, logits, NEG_INF)
    e = jnp.exp(logits - jnp.max(logits, axis=-1, keepdims=True))
    a_blk = e / jnp.sum(e, axis=-1, keepdims=True)   # exact divide (review correctness note)

    # --- graph propagation (single (M,M)@(M,D) MXU push) + blend with d -----
    d_new = RATIO * jnp.dot(a_blk, t, preferred_element_type=jnp.float32) + (1.0 - RATIO) * d

    # --- Fc_ClassBlock.classifier (eval): Dropout(0.75)->id, Linear(512, 2) padded to 128 lanes
    out_ref[...] = (jnp.dot(d_new, wc_ref[...], preferred_element_type=jnp.float32)
                    + bc_ref[...])


# ------------------------------ host wrapper --------------------------------
def sggnn_gcn_forward(d, w, kernel_params):
    """d: (P, G, D) float32, w: (G, G) float32 -> result (P*G, 2) float32."""
    p, g, dim = d.shape
    w1f, b1f, w2f, b2f, wc_pad, bc_pad = kernel_params

    m = p * g
    d2 = d.reshape(m, dim)                       # one lane-dense matmul slab
    wt_big = jnp.tile(jnp.transpose(w), (p, p))  # (m, m) layout plumbing for block-diag softmax

    out_pad = pl.pallas_call(
        sggnn_kernel,
        out_shape=jax.ShapeDtypeStruct((m, PAD_OUT), jnp.float32),
        grid=(1,),                                             # single step: everything fits VMEM
        in_specs=[
            pl.BlockSpec((m, dim), lambda i: (0, 0)),          # d rows
            pl.BlockSpec((m, m), lambda i: (0, 0)),            # tiled w^T
            pl.BlockSpec((dim, dim), lambda i: (0, 0)),        # W1 (BN folded)
            pl.BlockSpec((1, dim), lambda i: (0, 0)),
            pl.BlockSpec((dim, dim), lambda i: (0, 0)),        # W2 (BN folded)
            pl.BlockSpec((1, dim), lambda i: (0, 0)),
            pl.BlockSpec((dim, PAD_OUT), lambda i: (0, 0)),    # classifier W (lane-padded)
            pl.BlockSpec((1, PAD_OUT), lambda i: (0, 0)),
        ],
        out_specs=pl.BlockSpec((m, PAD_OUT), lambda i: (0, 0)),
        compiler_params=pltpu.CompilerParams(
            dimension_semantics=("arbitrary",)),
    )(d2, wt_big, w1f, b1f, w2f, b2f, wc_pad, bc_pad)

    return out_pad[:, :C_OUT]           # (P*G, 2)


# --------------------------- parameters (PyTorch init) ----------------------
def init_raw_params(key):
    """Raw module parameters mirroring weights_init_kaiming / weights_init_classifier.
    Linear weights stored transposed as (in, out). BN running stats at init (0, 1)."""
    ks = jax.random.split(key, 5)
    std_k = jnp.sqrt(2.0 / D)                                  # kaiming_normal_, mode='fan_out'

    w1 = std_k * jax.random.normal(ks[0], (D, D), jnp.float32)
    b1 = jnp.zeros((1, D), jnp.float32)
    g1 = 1.0 + 0.02 * jax.random.normal(ks[1], (1, D), jnp.float32)
    be1 = jnp.zeros((1, D), jnp.float32)
    rm1 = jnp.zeros((1, D), jnp.float32)
    rv1 = jnp.ones((1, D), jnp.float32)

    w2 = std_k * jax.random.normal(ks[2], (D, D), jnp.float32)
    b2 = jnp.zeros((1, D), jnp.float32)
    g2 = 1.0 + 0.02 * jax.random.normal(ks[3], (1, D), jnp.float32)
    be2 = jnp.zeros((1, D), jnp.float32)
    rm2 = jnp.zeros((1, D), jnp.float32)
    rv2 = jnp.ones((1, D), jnp.float32)

    wc = 0.001 * jax.random.normal(ks[4], (D, C_OUT), jnp.float32)   # classifier init
    bc = jnp.zeros((1, C_OUT), jnp.float32)

    return (w1, b1, g1, be1, rm1, rv1, w2, b2, g2, be2, rm2, rv2, wc, bc)


def fold_params(raw):
    """Fold eval-mode BatchNorm into the preceding Linear; pad classifier to 128 lanes.
    # TODO(synk): optionally cast w1f/w2f to bfloat16 (v5e/v6e HBM win) once validated
    # against the 5e-4 tolerance."""
    (w1, b1, g1, be1, rm1, rv1, w2, b2, g2, be2, rm2, rv2, wc, bc) = raw

    s1 = g1 / jnp.sqrt(rv1 + BN_EPS)
    sh1 = be1 - rm1 * s1
    w1f = w1 * s1
    b1f = b1 * s1 + sh1

    s2 = g2 / jnp.sqrt(rv2 + BN_EPS)
    sh2 = be2 - rm2 * s2
    w2f = w2 * s2
    b2f = b2 * s2 + sh2

    wc_pad = jnp.zeros((D, PAD_OUT), jnp.float32).at[:, :C_OUT].set(wc)
    bc_pad = jnp.zeros((1, PAD_OUT), jnp.float32).at[:, :C_OUT].set(bc)
    return (w1f, b1f, w2f, b2f, wc_pad, bc_pad)


# ------------------------------- reference ----------------------------------
def reference_forward(d, w, raw):
    """Plain-JAX, structure-faithful eval-mode forward of Sggnn_gcn."""
    (w1, b1, g1, be1, rm1, rv1, w2, b2, g2, be2, rm2, rv2, wc, bc) = raw
    p, g, dim = d.shape
    with jax.default_matmul_precision("highest"):
        x = d.reshape(p * g, dim)
        h = x @ w1 + b1
        h = (h - rm1) / jnp.sqrt(rv1 + BN_EPS) * g1 + be1
        h = jnp.where(h > 0, h, 0.1 * h)
        h = h @ w2 + b2
        h = (h - rm2) / jnp.sqrt(rv2 + BN_EPS) * g2 + be2
        t = jnp.where(h > 0, h, 0.1 * h).reshape(p, g, dim)

        logits = w - 100.0 * jnp.diag(jnp.diag(w))
        w_norm = jax.nn.softmax(logits, axis=0)

        d_new = jnp.einsum('pkc,kg->pgc', t, w_norm)
        d_new = RATIO * d_new + (1.0 - RATIO) * d

        result = d_new.reshape(p * g, dim) @ wc + bc
    return result                                              # (P*G, 2)


# --------------------------------- main --------------------------------------
if __name__ == "__main__":
    key = jax.random.PRNGKey(0)
    kd, kw, kp = jax.random.split(key, 3)

    d = jax.random.normal(kd, (P, G, D), jnp.float32)
    w = jax.random.normal(kw, (G, G), jnp.float32)

    raw = init_raw_params(kp)
    kparams = fold_params(raw)

    out = sggnn_gcn_forward(d, w, kparams)
    out = jax.block_until_ready(out)

    ref = reference_forward(d, w, raw)
    assert out.shape == ref.shape == (P * G, C_OUT)
    assert out.dtype == ref.dtype == jnp.float32
    max_err = float(jnp.max(jnp.abs(out - ref)))
    assert jnp.allclose(out, ref, atol=5e-4, rtol=1e-3), f"mismatch vs reference: {max_err}"

    print("KERNEL_OK")
</pallas_src>

<mosaic_0001>
module attributes {stable_mosaic.version = 11 : i64} {
  func.func @sggnn_kernel(%arg0: i32, %arg1: memref<64x512xf32, #tpu.memory_space<vmem>>, %arg2: memref<64x64xf32, #tpu.memory_space<vmem>>, %arg3: memref<512x512xf32, #tpu.memory_space<vmem>>, %arg4: memref<1x512xf32, #tpu.memory_space<vmem>>, %arg5: memref<512x512xf32, #tpu.memory_space<vmem>>, %arg6: memref<1x512xf32, #tpu.memory_space<vmem>>, %arg7: memref<512x128xf32, #tpu.memory_space<vmem>>, %arg8: memref<1x128xf32, #tpu.memory_space<vmem>>, %arg9: memref<64x128xf32, #tpu.memory_space<vmem>>) attributes {dimension_semantics = [#tpu.dimension_semantics<arbitrary>], iteration_bounds = array<i64: 1>, scalar_prefetch = 0 : i64, scratch_operands = 0 : i64, tpu.core_type = #tpu.core_type<tc>, window_params = [{pipeline_mode = #tpu.pipeline_mode<synchronous>, transform_indices = @transform_0, window_bounds = array<i64: 64, 512>}, {pipeline_mode = #tpu.pipeline_mode<synchronous>, transform_indices = @transform_1, window_bounds = array<i64: 64, 64>}, {pipeline_mode = #tpu.pipeline_mode<synchronous>, transform_indices = @transform_2, window_bounds = array<i64: 512, 512>}, {pipeline_mode = #tpu.pipeline_mode<synchronous>, transform_indices = @transform_3, window_bounds = array<i64: 1, 512>}, {pipeline_mode = #tpu.pipeline_mode<synchronous>, transform_indices = @transform_4, window_bounds = array<i64: 512, 512>}, {pipeline_mode = #tpu.pipeline_mode<synchronous>, transform_indices = @transform_5, window_bounds = array<i64: 1, 512>}, {pipeline_mode = #tpu.pipeline_mode<synchronous>, transform_indices = @transform_6, window_bounds = array<i64: 512, 128>}, {pipeline_mode = #tpu.pipeline_mode<synchronous>, transform_indices = @transform_7, window_bounds = array<i64: 1, 128>}, {pipeline_mode = #tpu.pipeline_mode<synchronous>, transform_indices = @transform_8, window_bounds = array<i64: 64, 128>}]} {
    %c0 = arith.constant 0 : index
    %c0_0 = arith.constant 0 : index
    %0 = vector.load %arg1[%c0, %c0_0] : memref<64x512xf32, #tpu.memory_space<vmem>>, vector<64x512xf32>
    %c0_1 = arith.constant 0 : index
    %c0_2 = arith.constant 0 : index
    %1 = vector.load %arg3[%c0_1, %c0_2] : memref<512x512xf32, #tpu.memory_space<vmem>>, vector<512x512xf32>
    %cst = arith.constant dense<0.000000e+00> : vector<64x512xf32>
    %2 = tpu.matmul %0, %1, %cst {dimension_numbers = #tpu.dot_dimension_numbers<[1], [0], [0], [1], [0, 0, 1, 1], [], []>} : vector<64x512xf32>, vector<512x512xf32>, vector<64x512xf32> -> vector<64x512xf32>
    %c0_3 = arith.constant 0 : index
    %c0_4 = arith.constant 0 : index
    %3 = vector.load %arg4[%c0_3, %c0_4] : memref<1x512xf32, #tpu.memory_space<vmem>>, vector<1x512xf32>
    %4 = vector.broadcast %3 : vector<1x512xf32> to vector<64x512xf32>
    %5 = arith.addf %2, %4 : vector<64x512xf32>
    %cst_5 = arith.constant 1.000000e-01 : f32
    %6 = vector.broadcast %cst_5 : f32 to vector<64x512xf32>
    %7 = arith.mulf %6, %5 : vector<64x512xf32>
    %8 = arith.maximumf %5, %7 : vector<64x512xf32>
    %c0_6 = arith.constant 0 : index
    %c0_7 = arith.constant 0 : index
    %9 = vector.load %arg5[%c0_6, %c0_7] : memref<512x512xf32, #tpu.memory_space<vmem>>, vector<512x512xf32>
    %cst_8 = arith.constant dense<0.000000e+00> : vector<64x512xf32>
    %10 = tpu.matmul %8, %9, %cst_8 {dimension_numbers = #tpu.dot_dimension_numbers<[1], [0], [0], [1], [0, 0, 1, 1], [], []>} : vector<64x512xf32>, vector<512x512xf32>, vector<64x512xf32> -> vector<64x512xf32>
    %c0_9 = arith.constant 0 : index
    %c0_10 = arith.constant 0 : index
    %11 = vector.load %arg6[%c0_9, %c0_10] : memref<1x512xf32, #tpu.memory_space<vmem>>, vector<1x512xf32>
    %12 = vector.broadcast %11 : vector<1x512xf32> to vector<64x512xf32>
    %13 = arith.addf %10, %12 : vector<64x512xf32>
    %cst_11 = arith.constant 1.000000e-01 : f32
    %14 = vector.broadcast %cst_11 : f32 to vector<64x512xf32>
    %15 = arith.mulf %14, %13 : vector<64x512xf32>
    %16 = arith.maximumf %13, %15 : vector<64x512xf32>
    %c0_12 = arith.constant 0 : index
    %c0_13 = arith.constant 0 : index
    %17 = vector.load %arg2[%c0_12, %c0_13] : memref<64x64xf32, #tpu.memory_space<vmem>>, vector<64x64xf32>
    %18 = tpu.iota {dimensions = array<i32: 0>} : vector<64x64xi32>
    %19 = tpu.iota {dimensions = array<i32: 1>} : vector<64x64xi32>
    %20 = arith.cmpi eq, %18, %19 : vector<64x64xi32>
    %cst_14 = arith.constant -9.900000e+01 : f32
    %21 = vector.broadcast %cst_14 : f32 to vector<64x64xf32>
    %22 = arith.mulf %21, %17 : vector<64x64xf32>
    %23 = arith.select %20, %22, %17 : vector<64x64xi1>, vector<64x64xf32>
    %c7_i32 = arith.constant 7 : i32
    %24 = vector.broadcast %c7_i32 : i32 to vector<64x64xi32>
    %25 = arith.andi %18, %24 : vector<64x64xi32>
    %26 = arith.subi %18, %25 : vector<64x64xi32>
    %c7_i32_15 = arith.constant 7 : i32
    %27 = vector.broadcast %c7_i32_15 : i32 to vector<64x64xi32>
    %28 = arith.andi %19, %27 : vector<64x64xi32>
    %29 = arith.subi %19, %28 : vector<64x64xi32>
    %30 = arith.cmpi eq, %26, %29 : vector<64x64xi32>
    %cst_16 = arith.constant -1.000000e+30 : f32
    %31 = vector.broadcast %cst_16 : f32 to vector<64x64xf32>
    %32 = arith.select %30, %23, %31 : vector<64x64xi1>, vector<64x64xf32>
    %cst_17 = arith.constant dense<0xFF800000> : vector<64xf32>
    %33 = vector.multi_reduction <maximumf>, %32, %cst_17 [1] : vector<64x64xf32> to vector<64xf32>
    %34 = vector.shape_cast %33 : vector<64xf32> to vector<64x1xf32>
    %35 = vector.broadcast %34 : vector<64x1xf32> to vector<64x64xf32>
    %36 = arith.subf %32, %35 : vector<64x64xf32>
    %37 = math.exp %36 : vector<64x64xf32>
    %cst_18 = arith.constant dense<0.000000e+00> : vector<64xf32>
    %38 = vector.multi_reduction <add>, %37, %cst_18 [1] : vector<64x64xf32> to vector<64xf32>
    %39 = vector.shape_cast %38 : vector<64xf32> to vector<64x1xf32>
    %40 = vector.broadcast %39 : vector<64x1xf32> to vector<64x64xf32>
    %41 = arith.divf %37, %40 : vector<64x64xf32>
    %cst_19 = arith.constant dense<0.000000e+00> : vector<64x512xf32>
    %42 = tpu.matmul %41, %16, %cst_19 {dimension_numbers = #tpu.dot_dimension_numbers<[1], [0], [0], [1], [0, 0, 1, 1], [], []>} : vector<64x64xf32>, vector<64x512xf32>, vector<64x512xf32> -> vector<64x512xf32>
    %cst_20 = arith.constant 0.899999976 : f32
    %43 = vector.broadcast %cst_20 : f32 to vector<64x512xf32>
    %44 = arith.mulf %43, %42 : vector<64x512xf32>
    %cst_21 = arith.constant 1.000000e-01 : f32
    %45 = vector.broadcast %cst_21 : f32 to vector<64x512xf32>
    %46 = arith.mulf %45, %0 : vector<64x512xf32>
    %47 = arith.addf %44, %46 : vector<64x512xf32>
    %c0_22 = arith.constant 0 : index
    %c0_23 = arith.constant 0 : index
    %48 = vector.load %arg7[%c0_22, %c0_23] : memref<512x128xf32, #tpu.memory_space<vmem>>, vector<512x128xf32>
    %cst_24 = arith.constant dense<0.000000e+00> : vector<64x128xf32>
    %49 = tpu.matmul %47, %48, %cst_24 {dimension_numbers = #tpu.dot_dimension_numbers<[1], [0], [0], [1], [0, 0, 1, 1], [], []>} : vector<64x512xf32>, vector<512x128xf32>, vector<64x128xf32> -> vector<64x128xf32>
    %c0_25 = arith.constant 0 : index
    %c0_26 = arith.constant 0 : index
    %50 = vector.load %arg8[%c0_25, %c0_26] : memref<1x128xf32, #tpu.memory_space<vmem>>, vector<1x128xf32>
    %51 = vector.broadcast %50 : vector<1x128xf32> to vector<64x128xf32>
    %52 = arith.addf %49, %51 : vector<64x128xf32>
    %c0_27 = arith.constant 0 : index
    %c0_28 = arith.constant 0 : index
    %53 = vector.load %arg9[%c0_27, %c0_28] : memref<64x128xf32, #tpu.memory_space<vmem>>, vector<64x128xf32>
    tpu.vector_store %arg9[%c0_27, %c0_28], %52 {strides = array<i32>} : memref<64x128xf32, #tpu.memory_space<vmem>>, vector<64x128xf32>,
    return
  }
  func.func @transform_0(%arg0: i32) -> (i32, i32) {
    %c0_i32 = arith.constant 0 : i32
    %c0_i32_0 = arith.constant 0 : i32
    %c0_i32_1 = arith.constant 0 : i32
    return %c0_i32, %c0_i32_0 : i32, i32
  }
  func.func @transform_1(%arg0: i32) -> (i32, i32) {
    %c0_i32 = arith.constant 0 : i32
    %c0_i32_0 = arith.constant 0 : i32
    %c0_i32_1 = arith.constant 0 : i32
    return %c0_i32, %c0_i32_0 : i32, i32
  }
  func.func @transform_2(%arg0: i32) -> (i32, i32) {
    %c0_i32 = arith.constant 0 : i32
    %c0_i32_0 = arith.constant 0 : i32
    %c0_i32_1 = arith.constant 0 : i32
    return %c0_i32, %c0_i32_0 : i32, i32
  }
  func.func @transform_3(%arg0: i32) -> (i32, i32) {
    %c0_i32 = arith.constant 0 : i32
    %c0_i32_0 = arith.constant 0 : i32
    %c0_i32_1 = arith.constant 0 : i32
    return %c0_i32, %c0_i32_0 : i32, i32
  }
  func.func @transform_4(%arg0: i32) -> (i32, i32) {
    %c0_i32 = arith.constant 0 : i32
    %c0_i32_0 = arith.constant 0 : i32
    %c0_i32_1 = arith.constant 0 : i32
    return %c0_i32, %c0_i32_0 : i32, i32
  }
  func.func @transform_5(%arg0: i32) -> (i32, i32) {
    %c0_i32 = arith.constant 0 : i32
    %c0_i32_0 = arith.constant 0 : i32
    %c0_i32_1 = arith.constant 0 : i32
    return %c0_i32, %c0_i32_0 : i32, i32
  }
  func.func @transform_6(%arg0: i32) -> (i32, i32) {
    %c0_i32 = arith.constant 0 : i32
    %c0_i32_0 = arith.constant 0 : i32
    %c0_i32_1 = arith.constant 0 : i32
    return %c0_i32, %c0_i32_0 : i32, i32
  }
  func.func @transform_7(%arg0: i32) -> (i32, i32) {
    %c0_i32 = arith.constant 0 : i32
    %c0_i32_0 = arith.constant 0 : i32
    %c0_i32_1 = arith.constant 0 : i32
    return %c0_i32, %c0_i32_0 : i32, i32
  }
  func.func @transform_8(%arg0: i32) -> (i32, i32) {
    %c0_i32 = arith.constant 0 : i32
    %c0_i32_0 = arith.constant 0 : i32
    %c0_i32_1 = arith.constant 0 : i32
    return %c0_i32, %c0_i32_0 : i32, i32
  }
}

</mosaic_0001>

<llo_original>
// kernel: tpu_custom_call.1
$region0: #{tpu_custom_call.1}
  #allocation0 [shape = 'u32[]', space=smem, size = 0x4, offset = 0x4, fixed_abs, tag = 'smem constant byte address 0x4 - core index']
  #allocation1 [shape = 'u32[144,128]{1,0:T(1,128)}', space=vmem, size = 0x12000, scoped, tag = 'internal scratch']
  %s0 = inlined_call_operand.hbm [shape: f32[64,512], index: 0, kind: input, shape index: {}]
  %s1 = inlined_call_operand.hbm [shape: f32[64,64], index: 1, kind: input, shape index: {}]
  %s2 = inlined_call_operand.hbm [shape: f32[512,512], index: 2, kind: input, shape index: {}]
  %s3 = inlined_call_operand.vmem [shape: f32[1,512], index: 3, kind: input, shape index: {}]
  %s4 = inlined_call_operand.hbm [shape: f32[512,512], index: 4, kind: input, shape index: {}]
  %s5 = inlined_call_operand.vmem [shape: f32[1,512], index: 5, kind: input, shape index: {}]
  %s6 = inlined_call_operand.hbm [shape: f32[512,128], index: 6, kind: input, shape index: {}]
  %s7 = inlined_call_operand.vmem [shape: f32[1,128], index: 7, kind: input, shape index: {}]
  %s8 = inlined_call_operand.hbm [shape: f32[64,128], index: 8, kind: output, shape index: {}]
  %s9 = sld [smem:[#allocation0]]
  $region62: #{tpu_custom_call.1} parent=0
    _
  %s11 = ssub.s32 1, %s9
  %s12 = scalar_select 0, %s11, %s9
  $region1: #{tpu_custom_call.1} parent=0
    #allocation2 [shape = 'u8[131072]{0}', space=vmem, size = 0x20000, scoped, tag = 'input window, operand 0, single buffered']
    #allocation3 [shape = 's32[1]{0}', space=sflag, size = 0x4, scoped, tag = 'scoped memory for tpu_custom_call.1']
    #allocation4 [shape = 's32[1]{0}', space=sflag, size = 0x4, scoped, tag = 'scoped memory for tpu_custom_call.1']
    #allocation5 [shape = 'u8[32768]{0}', space=vmem, size = 0x8000, scoped, tag = 'input window, operand 1, single buffered']
    #allocation6 [shape = 's32[1]{0}', space=sflag, size = 0x4, scoped, tag = 'scoped memory for tpu_custom_call.1']
    #allocation7 [shape = 'u8[1048576]{0}', space=vmem, size = 0x100000, scoped, tag = 'input window, operand 2, single buffered']
    #allocation8 [shape = 'u8[1048576]{0}', space=vmem, size = 0x100000, scoped, tag = 'input window, operand 4, single buffered']
    #allocation9 [shape = 's32[1]{0}', space=sflag, size = 0x4, scoped, tag = 'scoped memory for tpu_custom_call.1']
    #allocation10 [shape = 'u8[262144]{0}', space=vmem, size = 0x40000, scoped, tag = 'input window, operand 6, single buffered']
    #allocation11 [shape = 'u8[32768]{0}', space=vmem, size = 0x8000, scoped, tag = 'output window, operand 0, single buffered']
    %13 = vsyncpa [#allocation3], 0
    %14 = vsyncpa [#allocation6], 0
    %15 = vsyncpa [#allocation9], 0
    %16 = vsyncpa [#allocation4], 0
    // Predicated region
    $region2: #{tpu_custom_call.1} parent=1 // pred_check
      _
    $region3: #{tpu_custom_call.1} parent=1 // pred_check_branch
      %18 = sbr.rel (0) target = $region5
    $region4: #{tpu_custom_call.1} parent=1 // pred_region
      %s20 = ssub.s32 4096, 4096
      %21 = vsyncadd [#allocation3], %s20
      %s22 = sshll.u32 [#allocation2], 4
      %s23 = int_to_ptr.vmem [resolvable:$true] %s22
      %28 = dma.hbm_to_vmem [thread:$0]  %s0, 4096, %s23, [#allocation3], 512, 512, 32
    $region5: #{tpu_custom_call.1} parent=1 // pred_fallthru
      _
    // Predicated region
    $region6: #{tpu_custom_call.1} parent=1 // pred_check
      _
    $region7: #{tpu_custom_call.1} parent=1 // pred_check_branch
      %30 = sbr.rel (0) target = $region9
    $region8: #{tpu_custom_call.1} parent=1 // pred_region
      %s32 = ssub.s32 1024, 1024
      %33 = vsyncadd [#allocation6], %s32
      %s34 = sshll.u32 [#allocation5], 4
      %s35 = int_to_ptr.vmem [resolvable:$true] %s34
      %40 = dma.hbm_to_vmem [thread:$0]  %s1, 1024, %s35, [#allocation6], 128, 128, 8
    $region9: #{tpu_custom_call.1} parent=1 // pred_fallthru
      _
    // Predicated region
    $region10: #{tpu_custom_call.1} parent=1 // pred_check
      _
    $region11: #{tpu_custom_call.1} parent=1 // pred_check_branch
      %42 = sbr.rel (0) target = $region13
    $region12: #{tpu_custom_call.1} parent=1 // pred_region
      %s44 = ssub.s32 32768, 32768
      %45 = vsyncadd [#allocation6], %s44
      %s46 = sshll.u32 [#allocation7], 4
      %s47 = int_to_ptr.vmem [resolvable:$true] %s46
      %52 = dma.hbm_to_vmem [thread:$0]  %s2, 32768, %s47, [#allocation6], 512, 512, 32
    $region13: #{tpu_custom_call.1} parent=1 // pred_fallthru
      _
    // Predicated region
    $region14: #{tpu_custom_call.1} parent=1 // pred_check
      _
    $region15: #{tpu_custom_call.1} parent=1 // pred_check_branch
      %54 = sbr.rel (0) target = $region17
    $region16: #{tpu_custom_call.1} parent=1 // pred_region
      _
    $region17: #{tpu_custom_call.1} parent=1 // pred_fallthru
      _
    // Predicated region
    $region18: #{tpu_custom_call.1} parent=1 // pred_check
      _
    $region19: #{tpu_custom_call.1} parent=1 // pred_check_branch
      %56 = sbr.rel (0) target = $region21
    $region20: #{tpu_custom_call.1} parent=1 // pred_region
      %s58 = ssub.s32 32768, 32768
      %59 = vsyncadd [#allocation9], %s58
      %s60 = sshll.u32 [#allocation8], 4
      %s61 = int_to_ptr.vmem [resolvable:$true] %s60
      %66 = dma.hbm_to_vmem [thread:$0]  %s4, 32768, %s61, [#allocation9], 512, 512, 32
    $region21: #{tpu_custom_call.1} parent=1 // pred_fallthru
      _
    // Predicated region
    $region22: #{tpu_custom_call.1} parent=1 // pred_check
      _
    $region23: #{tpu_custom_call.1} parent=1 // pred_check_branch
      %68 = sbr.rel (0) target = $region25
    $region24: #{tpu_custom_call.1} parent=1 // pred_region
      _
    $region25: #{tpu_custom_call.1} parent=1 // pred_fallthru
      _
    // Predicated region
    $region26: #{tpu_custom_call.1} parent=1 // pred_check
      _
    $region27: #{tpu_custom_call.1} parent=1 // pred_check_branch
      %70 = sbr.rel (0) target = $region29
    $region28: #{tpu_custom_call.1} parent=1 // pred_region
      %s72 = ssub.s32 8192, 8192
      %73 = vsyncadd [#allocation9], %s72
      %s74 = sshll.u32 [#allocation10], 4
      %s75 = int_to_ptr.vmem [resolvable:$true] %s74
      %80 = dma.hbm_to_vmem [thread:$0]  %s6, 8192, %s75, [#allocation9], 128, 128, 8
    $region29: #{tpu_custom_call.1} parent=1 // pred_fallthru
      _
    // Predicated region
    $region30: #{tpu_custom_call.1} parent=1 // pred_check
      _
    $region31: #{tpu_custom_call.1} parent=1 // pred_check_branch
      %82 = sbr.rel (0) target = $region33
    $region32: #{tpu_custom_call.1} parent=1 // pred_region
      _
    $region33: #{tpu_custom_call.1} parent=1 // pred_fallthru
      _
    // Predicated region
    $region34: #{tpu_custom_call.1} parent=1 // pred_check
      _
    $region35: #{tpu_custom_call.1} parent=1 // pred_check_branch
      %84 = sbr.rel (0) target = $region37
    $region36: #{tpu_custom_call.1} parent=1 // pred_region
      %85 = dma.done [#allocation3], 4096
    $region37: #{tpu_custom_call.1} parent=1 // pred_fallthru
      _
    // Predicated region
    $region38: #{tpu_custom_call.1} parent=1 // pred_check
      _
    $region39: #{tpu_custom_call.1} parent=1 // pred_check_branch
      %87 = sbr.rel (0) target = $region41
    $region40: #{tpu_custom_call.1} parent=1 // pred_region
      %88 = dma.done [#allocation6], 1024
    $region41: #{tpu_custom_call.1} parent=1 // pred_fallthru
      _
    // Predicated region
    $region42: #{tpu_custom_call.1} parent=1 // pred_check
      _
    $region43: #{tpu_custom_call.1} parent=1 // pred_check_branch
      %90 = sbr.rel (0) target = $region45
    $region44: #{tpu_custom_call.1} parent=1 // pred_region
      %91 = dma.done [#allocation6], 32768
    $region45: #{tpu_custom_call.1} parent=1 // pred_fallthru
      _
    // Predicated region
    $region46: #{tpu_custom_call.1} parent=1 // pred_check
      _
    $region47: #{tpu_custom_call.1} parent=1 // pred_check_branch
      %93 = sbr.rel (0) target = $region49
    $region48: #{tpu_custom_call.1} parent=1 // pred_region
      %94 = dma.done [#allocation9], 32768
    $region49: #{tpu_custom_call.1} parent=1 // pred_fallthru
      _
    // Predicated region
    $region50: #{tpu_custom_call.1} parent=1 // pred_check
      _
    $region51: #{tpu_custom_call.1} parent=1 // pred_check_branch
      %96 = sbr.rel (0) target = $region53
    $region52: #{tpu_custom_call.1} parent=1 // pred_region
      %97 = dma.done [#allocation9], 8192
    $region53: #{tpu_custom_call.1} parent=1 // pred_fallthru
      _
    %v98 = vld [vmem:[#allocation2] sm:$0xff]
    %v99 = vld [vmem:[#allocation2 + $0x8] sm:$0xff]
    %v100 = vld [vmem:[#allocation2 + $0x10] sm:$0xff]
    %v101 = vld [vmem:[#allocation2 + $0x18] sm:$0xff]
    %v102 = vld [vmem:[#allocation2 + $0x20] sm:$0xff]
    %v103 = vld [vmem:[#allocation2 + $0x28] sm:$0xff]
    %v104 = vld [vmem:[#allocation2 + $0x30] sm:$0xff]
    %v105 = vld [vmem:[#allocation2 + $0x38] sm:$0xff]
    %v106 = vld [vmem:[#allocation2 + $0x40] sm:$0xff]
    %v107 = vld [vmem:[#allocation2 + $0x48] sm:$0xff]
    %v108 = vld [vmem:[#allocation2 + $0x50] sm:$0xff]
    %v109 = vld [vmem:[#allocation2 + $0x58] sm:$0xff]
    %v110 = vld [vmem:[#allocation2 + $0x60] sm:$0xff]
    %v111 = vld [vmem:[#allocation2 + $0x68] sm:$0xff]
    %v112 = vld [vmem:[#allocation2 + $0x70] sm:$0xff]
    %v113 = vld [vmem:[#allocation2 + $0x78] sm:$0xff]
    %v114 = vld [vmem:[#allocation2 + $0x80] sm:$0xff]
    %v115 = vld [vmem:[#allocation2 + $0x88] sm:$0xff]
    %v116 = vld [vmem:[#allocation2 + $0x90] sm:$0xff]
    %v117 = vld [vmem:[#allocation2 + $0x98] sm:$0xff]
    %v118 = vld [vmem:[#allocation2 + $0xa0] sm:$0xff]
    %v119 = vld [vmem:[#allocation2 + $0xa8] sm:$0xff]
    %v120 = vld [vmem:[#allocation2 + $0xb0] sm:$0xff]
    %v121 = vld [vmem:[#allocation2 + $0xb8] sm:$0xff]
    %v122 = vld [vmem:[#allocation2 + $0xc0] sm:$0xff]
    %v123 = vld [vmem:[#allocation2 + $0xc8] sm:$0xff]
    %v124 = vld [vmem:[#allocation2 + $0xd0] sm:$0xff]
    %v125 = vld [vmem:[#allocation2 + $0xd8] sm:$0xff]
    %v126 = vld [vmem:[#allocation2 + $0xe0] sm:$0xff]
    %v127 = vld [vmem:[#allocation2 + $0xe8] sm:$0xff]
    %v128 = vld [vmem:[#allocation2 + $0xf0] sm:$0xff]
    %v129 = vld [vmem:[#allocation2 + $0xf8] sm:$0xff]
    %v130 = vld [vmem:[#allocation7] sm:$0xff]
    %v131 = vld [vmem:[#allocation7 + $0x8] sm:$0xff]
    %v132 = vld [vmem:[#allocation7 + $0x10] sm:$0xff]
    %v133 = vld [vmem:[#allocation7 + $0x18] sm:$0xff]
    %v134 = vld [vmem:[#allocation7 + $0x20] sm:$0xff]
    %v135 = vld [vmem:[#allocation7 + $0x28] sm:$0xff]
    %v136 = vld [vmem:[#allocation7 + $0x30] sm:$0xff]
    %v137 = vld [vmem:[#allocation7 + $0x38] sm:$0xff]
    %v138 = vld [vmem:[#allocation7 + $0x40] sm:$0xff]
    %v139 = vld [vmem:[#allocation7 + $0x48] sm:$0xff]
    %v140 = vld [vmem:[#allocation7 + $0x50] sm:$0xff]
    %v141 = vld [vmem:[#allocation7 + $0x58] sm:$0xff]
    %v142 = vld [vmem:[#allocation7 + $0x60] sm:$0xff]
    %v143 = vld [vmem:[#allocation7 + $0x68] sm:$0xff]
    %v144 = vld [vmem:[#allocation7 + $0x70] sm:$0xff]
    %v145 = vld [vmem:[#allocation7 + $0x78] sm:$0xff]
    %v146 = vld [vmem:[#allocation7 + $0x80] sm:$0xff]
    %v147 = vld [vmem:[#allocation7 + $0x88] sm:$0xff]
    %v148 = vld [vmem:[#allocation7 + $0x90] sm:$0xff]
    %v149 = vld [vmem:[#allocation7 + $0x98] sm:$0xff]
    %v150 = vld [vmem:[#allocation7 + $0xa0] sm:$0xff]
    %v151 = vld [vmem:[#allocation7 + $0xa8] sm:$0xff]
    %v152 = vld [vmem:[#allocation7 + $0xb0] sm:$0xff]
    %v153 = vld [vmem:[#allocation7 + $0xb8] sm:$0xff]
    %v154 = vld [vmem:[#allocation7 + $0xc0] sm:$0xff]
    %v155 = vld [vmem:[#allocation7 + $0xc8] sm:$0xff]
    %v156 = vld [vmem:[#allocation7 + $0xd0] sm:$0xff]
    %v157 = vld [vmem:[#allocation7 + $0xd8] sm:$0xff]
    %v158 = vld [vmem:[#allocation7 + $0xe0] sm:$0xff]
    %v159 = vld [vmem:[#allocation7 + $0xe8] sm:$0xff]
    %v160 = vld [vmem:[#allocation7 + $0xf0] sm:$0xff]
    %v161 = vld [vmem:[#allocation7 + $0xf8] sm:$0xff]
    %v162 = vld [vmem:[#allocation7 + $0x100] sm:$0xff]
    %v163 = vld [vmem:[#allocation7 + $0x108] sm:$0xff]
    %v164 = vld [vmem:[#allocation7 + $0x110] sm:$0xff]
    %v165 = vld [vmem:[#allocation7 + $0x118] sm:$0xff]
    %v166 = vld [vmem:[#allocation7 + $0x120] sm:$0xff]
    %v167 = vld [vmem:[#allocation7 + $0x128] sm:$0xff]
    %v168 = vld [vmem:[#allocation7 + $0x130] sm:$0xff]
    %v169 = vld [vmem:[#allocation7 + $0x138] sm:$0xff]
    %v170 = vld [vmem:[#allocation7 + $0x140] sm:$0xff]
    %v171 = vld [vmem:[#allocation7 + $0x148] sm:$0xff]
    %v172 = vld [vmem:[#allocation7 + $0x150] sm:$0xff]
    %v173 = vld [vmem:[#allocation7 + $0x158] sm:$0xff]
    %v174 = vld [vmem:[#allocation7 + $0x160] sm:$0xff]
    %v175 = vld [vmem:[#allocation7 + $0x168] sm:$0xff]
    %v176 = vld [vmem:[#allocation7 + $0x170] sm:$0xff]
    %v177 = vld [vmem:[#allocation7 + $0x178] sm:$0xff]
    %v178 = vld [vmem:[#allocation7 + $0x180] sm:$0xff]
    %v179 = vld [vmem:[#allocation7 + $0x188] sm:$0xff]
    %v180 = vld [vmem:[#allocation7 + $0x190] sm:$0xff]
    %v181 = vld [vmem:[#allocation7 + $0x198] sm:$0xff]
    %v182 = vld [vmem:[#allocation7 + $0x1a0] sm:$0xff]
    %v183 = vld [vmem:[#allocation7 + $0x1a8] sm:$0xff]
    %v184 = vld [vmem:[#allocation7 + $0x1b0] sm:$0xff]
    %v185 = vld [vmem:[#allocation7 + $0x1b8] sm:$0xff]
    %v186 = vld [vmem:[#allocation7 + $0x1c0] sm:$0xff]
    %v187 = vld [vmem:[#allocation7 + $0x1c8] sm:$0xff]
    %v188 = vld [vmem:[#allocation7 + $0x1d0] sm:$0xff]
    %v189 = vld [vmem:[#allocation7 + $0x1d8] sm:$0xff]
    %v190 = vld [vmem:[#allocation7 + $0x1e0] sm:$0xff]
    %v191 = vld [vmem:[#allocation7 + $0x1e8] sm:$0xff]
    %v192 = vld [vmem:[#allocation7 + $0x1f0] sm:$0xff]
    %v193 = vld [vmem:[#allocation7 + $0x1f8] sm:$0xff]
    %v194 = vld [vmem:[#allocation7 + $0x200] sm:$0xff]
    %v195 = vld [vmem:[#allocation7 + $0x208] sm:$0xff]
    %v196 = vld [vmem:[#allocation7 + $0x210] sm:$0xff]
    %v197 = vld [vmem:[#allocation7 + $0x218] sm:$0xff]
    %v198 = vld [vmem:[#allocation7 + $0x220] sm:$0xff]
    %v199 = vld [vmem:[#allocation7 + $0x228] sm:$0xff]
    %v200 = vld [vmem:[#allocation7 + $0x230] sm:$0xff]
    %v201 = vld [vmem:[#allocation7 + $0x238] sm:$0xff]
    %v202 = vld [vmem:[#allocation7 + $0x240] sm:$0xff]
    %v203 = vld [vmem:[#allocation7 + $0x248] sm:$0xff]
    %v204 = vld [vmem:[#allocation7 + $0x250] sm:$0xff]
    %v205 = vld [vmem:[#allocation7 + $0x258] sm:$0xff]
    %v206 = vld [vmem:[#allocation7 + $0x260] sm:$0xff]
    %v207 = vld [vmem:[#allocation7 + $0x268] sm:$0xff]
    %v208 = vld [vmem:[#allocation7 + $0x270] sm:$0xff]
    %v209 = vld [vmem:[#allocation7 + $0x278] sm:$0xff]
    %v210 = vld [vmem:[#allocation7 + $0x280] sm:$0xff]
    %v211 = vld [vmem:[#allocation7 + $0x288] sm:$0xff]
    %v212 = vld [vmem:[#allocation7 + $0x290] sm:$0xff]
    %v213 = vld [vmem:[#allocation7 + $0x298] sm:$0xff]
    %v214 = vld [vmem:[#allocation7 + $0x2a0] sm:$0xff]
    %v215 = vld [vmem:[#allocation7 + $0x2a8] sm:$0xff]
    %v216 = vld [vmem:[#allocation7 + $0x2b0] sm:$0xff]
    %v217 = vld [vmem:[#allocation7 + $0x2b8] sm:$0xff]
    %v218 = vld [vmem:[#allocation7 + $0x2c0] sm:$0xff]
    %v219 = vld [vmem:[#allocation7 + $0x2c8] sm:$0xff]
    %v220 = vld [vmem:[#allocation7 + $0x2d0] sm:$0xff]
    %v221 = vld [vmem:[#allocation7 + $0x2d8] sm:$0xff]
    %v222 = vld [vmem:[#allocation7 + $0x2e0] sm:$0xff]
    %v223 = vld [vmem:[#allocation7 + $0x2e8] sm:$0xff]
    %v224 = vld [vmem:[#allocation7 + $0x2f0] sm:$0xff]
    %v225 = vld [vmem:[#allocation7 + $0x2f8] sm:$0xff]
    %v226 = vld [vmem:[#allocation7 + $0x300] sm:$0xff]
    %v227 = vld [vmem:[#allocation7 + $0x308] sm:$0xff]
    %v228 = vld [vmem:[#allocation7 + $0x310] sm:$0xff]
    %v229 = vld [vmem:[#allocation7 + $0x318] sm:$0xff]
    %v230 = vld [vmem:[#allocation7 + $0x320] sm:$0xff]
    %v231 = vld [vmem:[#allocation7 + $0x328] sm:$0xff]
    %v232 = vld [vmem:[#allocation7 + $0x330] sm:$0xff]
    %v233 = vld [vmem:[#allocation7 + $0x338] sm:$0xff]
    %v234 = vld [vmem:[#allocation7 + $0x340] sm:$0xff]
    %v235 = vld [vmem:[#allocation7 + $0x348] sm:$0xff]
    %v236 = vld [vmem:[#allocation7 + $0x350] sm:$0xff]
    %v237 = vld [vmem:[#allocation7 + $0x358] sm:$0xff]
    %v238 = vld [vmem:[#allocation7 + $0x360] sm:$0xff]
    %v239 = vld [vmem:[#allocation7 + $0x368] sm:$0xff]
    %v240 = vld [vmem:[#allocation7 + $0x370] sm:$0xff]
    %v241 = vld [vmem:[#allocation7 + $0x378] sm:$0xff]
    %v242 = vld [vmem:[#allocation7 + $0x380] sm:$0xff]
    %v243 = vld [vmem:[#allocation7 + $0x388] sm:$0xff]
    %v244 = vld [vmem:[#allocation7 + $0x390] sm:$0xff]
    %v245 = vld [vmem:[#allocation7 + $0x398] sm:$0xff]
    %v246 = vld [vmem:[#allocation7 + $0x3a0] sm:$0xff]
    %v247 = vld [vmem:[#allocation7 + $0x3a8] sm:$0xff]
    %v248 = vld [vmem:[#allocation7 + $0x3b0] sm:$0xff]
    %v249 = vld [vmem:[#allocation7 + $0x3b8] sm:$0xff]
    %v250 = vld [vmem:[#allocation7 + $0x3c0] sm:$0xff]
    %v251 = vld [vmem:[#allocation7 + $0x3c8] sm:$0xff]
    %v252 = vld [vmem:[#allocation7 + $0x3d0] sm:$0xff]
    %v253 = vld [vmem:[#allocation7 + $0x3d8] sm:$0xff]
    %v254 = vld [vmem:[#allocation7 + $0x3e0] sm:$0xff]
    %v255 = vld [vmem:[#allocation7 + $0x3e8] sm:$0xff]
    %v256 = vld [vmem:[#allocation7 + $0x3f0] sm:$0xff]
    %v257 = vld [vmem:[#allocation7 + $0x3f8] sm:$0xff]
    %v258 = vld [vmem:[#allocation7 + $0x400] sm:$0xff]
    %v259 = vld [vmem:[#allocation7 + $0x408] sm:$0xff]
    %v260 = vld [vmem:[#allocation7 + $0x410] sm:$0xff]
    %v261 = vld [vmem:[#allocation7 + $0x418] sm:$0xff]
    %v262 = vld [vmem:[#allocation7 + $0x420] sm:$0xff]
    %v263 = vld [vmem:[#allocation7 + $0x428] sm:$0xff]
    %v264 = vld [vmem:[#allocation7 + $0x430] sm:$0xff]
    %v265 = vld [vmem:[#allocation7 + $0x438] sm:$0xff]
    %v266 = vld [vmem:[#allocation7 + $0x440] sm:$0xff]
    %v267 = vld [vmem:[#allocation7 + $0x448] sm:$0xff]
    %v268 = vld [vmem:[#allocation7 + $0x450] sm:$0xff]
    %v269 = vld [vmem:[#allocation7 + $0x458] sm:$0xff]
    %v270 = vld [vmem:[#allocation7 + $0x460] sm:$0xff]
    %v271 = vld [vmem:[#allocation7 + $0x468] sm:$0xff]
    %v272 = vld [vmem:[#allocation7 + $0x470] sm:$0xff]
    %v273 = vld [vmem:[#allocation7 + $0x478] sm:$0xff]
    %v274 = vld [vmem:[#allocation7 + $0x480] sm:$0xff]
    %v275 = vld [vmem:[#allocation7 + $0x488] sm:$0xff]
    %v276 = vld [vmem:[#allocation7 + $0x490] sm:$0xff]
    %v277 = vld [vmem:[#allocation7 + $0x498] sm:$0xff]
    %v278 = vld [vmem:[#allocation7 + $0x4a0] sm:$0xff]
    %v279 = vld [vmem:[#allocation7 + $0x4a8] sm:$0xff]
    %v280 = vld [vmem:[#allocation7 + $0x4b0] sm:$0xff]
    %v281 = vld [vmem:[#allocation7 + $0x4b8] sm:$0xff]
    %v282 = vld [vmem:[#allocation7 + $0x4c0] sm:$0xff]
    %v283 = vld [vmem:[#allocation7 + $0x4c8] sm:$0xff]
    %v284 = vld [vmem:[#allocation7 + $0x4d0] sm:$0xff]
    %v285 = vld [vmem:[#allocation7 + $0x4d8] sm:$0xff]
    %v286 = vld [vmem:[#allocation7 + $0x4e0] sm:$0xff]
    %v287 = vld [vmem:[#allocation7 + $0x4e8] sm:$0xff]
    %v288 = vld [vmem:[#allocation7 + $0x4f0] sm:$0xff]
    %v289 = vld [vmem:[#allocation7 + $0x4f8] sm:$0xff]
    %v290 = vld [vmem:[#allocation7 + $0x500] sm:$0xff]
    %v291 = vld [vmem:[#allocation7 + $0x508] sm:$0xff]
    %v292 = vld [vmem:[#allocation7 + $0x510] sm:$0xff]
    %v293 = vld [vmem:[#allocation7 + $0x518] sm:$0xff]
    %v294 = vld [vmem:[#allocation7 + $0x520] sm:$0xff]
    %v295 = vld [vmem:[#allocation7 + $0x528] sm:$0xff]
    %v296 = vld [vmem:[#allocation7 + $0x530] sm:$0xff]
    %v297 = vld [vmem:[#allocation7 + $0x538] sm:$0xff]
    %v298 = vld [vmem:[#allocation7 + $0x540] sm:$0xff]
    %v299 = vld [vmem:[#allocation7 + $0x548] sm:$0xff]
    %v300 = vld [vmem:[#allocation7 + $0x550] sm:$0xff]
    %v301 = vld [vmem:[#allocation7 + $0x558] sm:$0xff]
    %v302 = vld [vmem:[#allocation7 + $0x560] sm:$0xff]
    %v303 = vld [vmem:[#allocation7 + $0x568] sm:$0xff]
    %v304 = vld [vmem:[#allocation7 + $0x570] sm:$0xff]
    %v305 = vld [vmem:[#allocation7 + $0x578] sm:$0xff]
    %v306 = vld [vmem:[#allocation7 + $0x580] sm:$0xff]
    %v307 = vld [vmem:[#allocation7 + $0x588] sm:$0xff]
    %v308 = vld [vmem:[#allocation7 + $0x590] sm:$0xff]
    %v309 = vld [vmem:[#allocation7 + $0x598] sm:$0xff]
    %v310 = vld [vmem:[#allocation7 + $0x5a0] sm:$0xff]
    %v311 = vld [vmem:[#allocation7 + $0x5a8] sm:$0xff]
    %v312 = vld [vmem:[#allocation7 + $0x5b0] sm:$0xff]
    %v313 = vld [vmem:[#allocation7 + $0x5b8] sm:$0xff]
    %v314 = vld [vmem:[#allocation7 + $0x5c0] sm:$0xff]
    %v315 = vld [vmem:[#allocation7 + $0x5c8] sm:$0xff]
    %v316 = vld [vmem:[#allocation7 + $0x5d0] sm:$0xff]
    %v317 = vld [vmem:[#allocation7 + $0x5d8] sm:$0xff]
    %v318 = vld [vmem:[#allocation7 + $0x5e0] sm:$0xff]
    %v319 = vld [vmem:[#allocation7 + $0x5e8] sm:$0xff]
    %v320 = vld [vmem:[#allocation7 + $0x5f0] sm:$0xff]
    %v321 = vld [vmem:[#allocation7 + $0x5f8] sm:$0xff]
    %v322 = vld [vmem:[#allocation7 + $0x600] sm:$0xff]
    %v323 = vld [vmem:[#allocation7 + $0x608] sm:$0xff]
    %v324 = vld [vmem:[#allocation7 + $0x610] sm:$0xff]
    %v325 = vld [vmem:[#allocation7 + $0x618] sm:$0xff]
    %v326 = vld [vmem:[#allocation7 + $0x620] sm:$0xff]
    %v327 = vld [vmem:[#allocation7 + $0x628] sm:$0xff]
    %v328 = vld [vmem:[#allocation7 + $0x630] sm:$0xff]
    %v329 = vld [vmem:[#allocation7 + $0x638] sm:$0xff]
    %v330 = vld [vmem:[#allocation7 + $0x640] sm:$0xff]
    %v331 = vld [vmem:[#allocation7 + $0x648] sm:$0xff]
    %v332 = vld [vmem:[#allocation7 + $0x650] sm:$0xff]
    %v333 = vld [vmem:[#allocation7 + $0x658] sm:$0xff]
    %v334 = vld [vmem:[#allocation7 + $0x660] sm:$0xff]
    %v335 = vld [vmem:[#allocation7 + $0x668] sm:$0xff]
    %v336 = vld [vmem:[#allocation7 + $0x670] sm:$0xff]
    %v337 = vld [vmem:[#allocation7 + $0x678] sm:$0xff]
    %v338 = vld [vmem:[#allocation7 + $0x680] sm:$0xff]
    %v339 = vld [vmem:[#allocation7 + $0x688] sm:$0xff]
    %v340 = vld [vmem:[#allocation7 + $0x690] sm:$0xff]
    %v341 = vld [vmem:[#allocation7 + $0x698] sm:$0xff]
    %v342 = vld [vmem:[#allocation7 + $0x6a0] sm:$0xff]
    %v343 = vld [vmem:[#allocation7 + $0x6a8] sm:$0xff]
    %v344 = vld [vmem:[#allocation7 + $0x6b0] sm:$0xff]
    %v345 = vld [vmem:[#allocation7 + $0x6b8] sm:$0xff]
    %v346 = vld [vmem:[#allocation7 + $0x6c0] sm:$0xff]
    %v347 = vld [vmem:[#allocation7 + $0x6c8] sm:$0xff]
    %v348 = vld [vmem:[#allocation7 + $0x6d0] sm:$0xff]
    %v349 = vld [vmem:[#allocation7 + $0x6d8] sm:$0xff]
    %v350 = vld [vmem:[#allocation7 + $0x6e0] sm:$0xff]
    %v351 = vld [vmem:[#allocation7 + $0x6e8] sm:$0xff]
    %v352 = vld [vmem:[#allocation7 + $0x6f0] sm:$0xff]
    %v353 = vld [vmem:[#allocation7 + $0x6f8] sm:$0xff]
    %v354 = vld [vmem:[#allocation7 + $0x700] sm:$0xff]
    %v355 = vld [vmem:[#allocation7 + $0x708] sm:$0xff]
    %v356 = vld [vmem:[#allocation7 + $0x710] sm:$0xff]
    %v357 = vld [vmem:[#allocation7 + $0x718] sm:$0xff]
    %v358 = vld [vmem:[#allocation7 + $0x720] sm:$0xff]
    %v359 = vld [vmem:[#allocation7 + $0x728] sm:$0xff]
    %v360 = vld [vmem:[#allocation7 + $0x730] sm:$0xff]
    %v361 = vld [vmem:[#allocation7 + $0x738] sm:$0xff]
    %v362 = vld [vmem:[#allocation7 + $0x740] sm:$0xff]
    %v363 = vld [vmem:[#allocation7 + $0x748] sm:$0xff]
    %v364 = vld [vmem:[#allocation7 + $0x750] sm:$0xff]
    %v365 = vld [vmem:[#allocation7 + $0x758] sm:$0xff]
    %v366 = vld [vmem:[#allocation7 + $0x760] sm:$0xff]
    %v367 = vld [vmem:[#allocation7 + $0x768] sm:$0xff]
    %v368 = vld [vmem:[#allocation7 + $0x770] sm:$0xff]
    %v369 = vld [vmem:[#allocation7 + $0x778] sm:$0xff]
    %v370 = vld [vmem:[#allocation7 + $0x780] sm:$0xff]
    %v371 = vld [vmem:[#allocation7 + $0x788] sm:$0xff]
    %v372 = vld [vmem:[#allocation7 + $0x790] sm:$0xff]
    %v373 = vld [vmem:[#allocation7 + $0x798] sm:$0xff]
    %v374 = vld [vmem:[#allocation7 + $0x7a0] sm:$0xff]
    %v375 = vld [vmem:[#allocation7 + $0x7a8] sm:$0xff]
    %v376 = vld [vmem:[#allocation7 + $0x7b0] sm:$0xff]
    %v377 = vld [vmem:[#allocation7 + $0x7b8] sm:$0xff]
    %v378 = vld [vmem:[#allocation7 + $0x7c0] sm:$0xff]
    %v379 = vld [vmem:[#allocation7 + $0x7c8] sm:$0xff]
    %v380 = vld [vmem:[#allocation7 + $0x7d0] sm:$0xff]
    %v381 = vld [vmem:[#allocation7 + $0x7d8] sm:$0xff]
    %v382 = vld [vmem:[#allocation7 + $0x7e0] sm:$0xff]
    %v383 = vld [vmem:[#allocation7 + $0x7e8] sm:$0xff]
    %v384 = vld [vmem:[#allocation7 + $0x7f0] sm:$0xff]
    %v385 = vld [vmem:[#allocation7 + $0x7f8] sm:$0xff]
    %v386 = vld [vmem:[%s3] sm:$0xf]
    %v388 = vlaneseq
    %v389 = vshrl.u32 %v388, 7
    %v390 = vsub.s32 0, %v389
    %v391 = vrot.slane %v386, %v390
    %v392 = vlaneseq
    %v393 = vshrl.u32 %v392, 7
    %v394 = vsub.s32 1, %v393
    %v395 = vrot.slane %v386, %v394
    %v396 = vlaneseq
    %v397 = vshrl.u32 %v396, 7
    %v398 = vsub.s32 2, %v397
    %v399 = vrot.slane %v386, %v398
    %v400 = vlaneseq
    %v401 = vshrl.u32 %v400, 7
    %v402 = vsub.s32 3, %v401
    %v403 = vrot.slane %v386, %v402
    %408 = vmatprep.subr.mxu0 %v131
    %409 = vmatpush1.msra.mxu0 %v130
    %410 = vmatprep.subr.mxu0 %v135
    %411 = vmatpush1.msra.mxu0 %v134
    %412 = vmatprep.subr.mxu0 %v139
    %413 = vmatpush1.msra.mxu0 %v138
    %414 = vmatprep.subr.mxu0 %v143
    %415 = vmatpush1.msra.mxu0 %v142
    %416 = vmatprep.subr.mxu0 %v147
    %417 = vmatpush1.msra.mxu0 %v146
    %418 = vmatprep.subr.mxu0 %v151
    %419 = vmatpush1.msra.mxu0 %v150
    %420 = vmatprep.subr.mxu0 %v155
    %421 = vmatpush1.msra.mxu0 %v154
    %422 = vmatprep.subr.mxu0 %v159
    %423 = vmatpush1.msra.mxu0 %v158
    %424 = vmatprep.subr.mxu0 %v163
    %425 = vmatpush1.msra.mxu0 %v162
    %426 = vmatprep.subr.mxu0 %v167
    %427 = vmatpush1.msra.mxu0 %v166
    %428 = vmatprep.subr.mxu0 %v171
    %429 = vmatpush1.msra.mxu0 %v170
    %430 = vmatprep.subr.mxu0 %v175
    %431 = vmatpush1.msra.mxu0 %v174
    %432 = vmatprep.subr.mxu0 %v179
    %433 = vmatpush1.msra.mxu0 %v178
    %434 = vmatprep.subr.mxu0 %v183
    %435 = vmatpush1.msra.mxu0 %v182
    %436 = vmatprep.subr.mxu0 %v187
    %437 = vmatpush1.msra.mxu0 %v186
    %438 = vmatprep.subr.mxu0 %v191
    %439 = vmatpush1.msra.mxu0 %v190
    %440 = vmatprep.subr.mxu0 %v195
    %441 = vmatpush1.msra.mxu0 %v194
    %442 = vmatprep.subr.mxu0 %v199
    %443 = vmatpush1.msra.mxu0 %v198
    %444 = vmatprep.subr.mxu0 %v203
    %445 = vmatpush1.msra.mxu0 %v202
    %446 = vmatprep.subr.mxu0 %v207
    %447 = vmatpush1.msra.mxu0 %v206
    %448 = vmatprep.subr.mxu0 %v211
    %449 = vmatpush1.msra.mxu0 %v210
    %450 = vmatprep.subr.mxu0 %v215
    %451 = vmatpush1.msra.mxu0 %v214
    %452 = vmatprep.subr.mxu0 %v219
    %453 = vmatpush1.msra.mxu0 %v218
    %454 = vmatprep.subr.mxu0 %v223
    %455 = vmatpush1.msra.mxu0 %v222
    %456 = vmatprep.subr.mxu0 %v227
    %457 = vmatpush1.msra.mxu0 %v226
    %458 = vmatprep.subr.mxu0 %v231
    %459 = vmatpush1.msra.mxu0 %v230
    %460 = vmatprep.subr.mxu0 %v235
    %461 = vmatpush1.msra.mxu0 %v234
    %462 = vmatprep.subr.mxu0 %v239
    %463 = vmatpush1.msra.mxu0 %v238
    %464 = vmatprep.subr.mxu0 %v243
    %465 = vmatpush1.msra.mxu0 %v242
    %466 = vmatprep.subr.mxu0 %v247
    %467 = vmatpush1.msra.mxu0 %v246
    %468 = vmatprep.subr.mxu0 %v251
    %469 = vmatpush1.msra.mxu0 %v250
    %470 = vmatprep.subr.mxu0 %v255
    %471 = vmatpush1.msra.mxu0 %v254
    %472 = vmatprep.mubr.f32.mxu0 %v99
    %473 = vmatmul.mubr.f32.gmra.mrb[0].mxu0 %v98
    %v474 = vpop.f32.mrb[0].mxu0
    %v475 = vadd.f32 %v391, %v474
    %v476 = vpop.f32.mrb[0].mxu0
    %v477 = vadd.f32 %v395, %v476
    %478 = vmatprep.mubr.f32.mxu0 %v103
    %479 = vmatmul.mubr.f32.gmra.mrb[0].mxu0 %v102
    %v480 = vpop.f32.mrb[0].mxu0
    %v481 = vadd.f32 %v391, %v480
    %v482 = vpop.f32.mrb[0].mxu0
    %v483 = vadd.f32 %v395, %v482
    %484 = vmatprep.mubr.f32.mxu0 %v107
    %485 = vmatmul.mubr.f32.gmra.mrb[0].mxu0 %v106
    %v486 = vpop.f32.mrb[0].mxu0
    %v487 = vadd.f32 %v391, %v486
    %v488 = vpop.f32.mrb[0].mxu0
    %v489 = vadd.f32 %v395, %v488
    %490 = vmatprep.mubr.f32.mxu0 %v111
    %491 = vmatmul.mubr.f32.gmra.mrb[0].mxu0 %v110
    %v492 = vpop.f32.mrb[0].mxu0
    %v493 = vadd.f32 %v391, %v492
    %v494 = vpop.f32.mrb[0].mxu0
    %v495 = vadd.f32 %v395, %v494
    %496 = vmatprep.mubr.f32.mxu0 %v115
    %497 = vmatmul.mubr.f32.gmra.mrb[0].mxu0 %v114
    %v498 = vpop.f32.mrb[0].mxu0
    %v499 = vadd.f32 %v391, %v498
    %v500 = vpop.f32.mrb[0].mxu0
    %v501 = vadd.f32 %v395, %v500
    %502 = vmatprep.mubr.f32.mxu0 %v119
    %503 = vmatmul.mubr.f32.gmra.mrb[0].mxu0 %v118
    %v504 = vpop.f32.mrb[0].mxu0
    %v505 = vadd.f32 %v391, %v504
    %v506 = vpop.f32.mrb[0].mxu0
    %v507 = vadd.f32 %v395, %v506
    %508 = vmatprep.mubr.f32.mxu0 %v123
    %509 = vmatmul.mubr.f32.gmra.mrb[0].mxu0 %v122
    %v510 = vpop.f32.mrb[0].mxu0
    %v511 = vadd.f32 %v391, %v510
    %v512 = vpop.f32.mrb[0].mxu0
    %v513 = vadd.f32 %v395, %v512
    %514 = vmatprep.mubr.f32.mxu0 %v127
    %515 = vmatmul.mubr.f32.gmra.mrb[0].mxu0 %v126
    %v516 = vpop.f32.mrb[0].mxu0
    %v517 = vadd.f32 %v391, %v516
    %v518 = vpop.f32.mrb[0].mxu0
    %v519 = vadd.f32 %v395, %v518
    %520 = vdwg.mxu0
    %521 = vmatprep.subr.mxu0 %v259
    %522 = vmatpush1.msra.mxu0 %v258
    %523 = vmatprep.subr.mxu0 %v263
    %524 = vmatpush1.msra.mxu0 %v262
    %525 = vmatprep.subr.mxu0 %v267
    %526 = vmatpush1.msra.mxu0 %v266
    %527 = vmatprep.subr.mxu0 %v271
    %528 = vmatpush1.msra.mxu0 %v270
    %529 = vmatprep.subr.mxu0 %v275
    %530 = vmatpush1.msra.mxu0 %v274
    %531 = vmatprep.subr.mxu0 %v279
    %532 = vmatpush1.msra.mxu0 %v278
    %533 = vmatprep.subr.mxu0 %v283
    %534 = vmatpush1.msra.mxu0 %v282
    %535 = vmatprep.subr.mxu0 %v287
    %536 = vmatpush1.msra.mxu0 %v286
    %537 = vmatprep.subr.mxu0 %v291
    %538 = vmatpush1.msra.mxu0 %v290
    %539 = vmatprep.subr.mxu0 %v295
    %540 = vmatpush1.msra.mxu0 %v294
    %541 = vmatprep.subr.mxu0 %v299
    %542 = vmatpush1.msra.mxu0 %v298
    %543 = vmatprep.subr.mxu0 %v303
    %544 = vmatpush1.msra.mxu0 %v302
    %545 = vmatprep.subr.mxu0 %v307
    %546 = vmatpush1.msra.mxu0 %v306
    %547 = vmatprep.subr.mxu0 %v311
    %548 = vmatpush1.msra.mxu0 %v310
    %549 = vmatprep.subr.mxu0 %v315
    %550 = vmatpush1.msra.mxu0 %v314
    %551 = vmatprep.subr.mxu0 %v319
    %552 = vmatpush1.msra.mxu0 %v318
    %553 = vmatprep.subr.mxu0 %v323
    %554 = vmatpush1.msra.mxu0 %v322
    %555 = vmatprep.subr.mxu0 %v327
    %556 = vmatpush1.msra.mxu0 %v326
    %557 = vmatprep.subr.mxu0 %v331
    %558 = vmatpush1.msra.mxu0 %v330
    %559 = vmatprep.subr.mxu0 %v335
    %560 = vmatpush1.msra.mxu0 %v334
    %561 = vmatprep.subr.mxu0 %v339
    %562 = vmatpush1.msra.mxu0 %v338
    %563 = vmatprep.subr.mxu0 %v343
    %564 = vmatpush1.msra.mxu0 %v342
    %565 = vmatprep.subr.mxu0 %v347
    %566 = vmatpush1.msra.mxu0 %v346
    %567 = vmatprep.subr.mxu0 %v351
    %568 = vmatpush1.msra.mxu0 %v350
    %569 = vmatprep.subr.mxu0 %v355
    %570 = vmatpush1.msra.mxu0 %v354
    %571 = vmatprep.subr.mxu0 %v359
    %572 = vmatpush1.msra.mxu0 %v358
    %573 = vmatprep.subr.mxu0 %v363
    %574 = vmatpush1.msra.mxu0 %v362
    %575 = vmatprep.subr.mxu0 %v367
    %576 = vmatpush1.msra.mxu0 %v366
    %577 = vmatprep.subr.mxu0 %v371
    %578 = vmatpush1.msra.mxu0 %v370
    %579 = vmatprep.subr.mxu0 %v375
    %580 = vmatpush1.msra.mxu0 %v374
    %581 = vmatprep.subr.mxu0 %v379
    %582 = vmatpush1.msra.mxu0 %v378
    %583 = vmatprep.subr.mxu0 %v383
    %584 = vmatpush1.msra.mxu0 %v382
    %585 = vmatprep.mubr.f32.mxu0 %v101
    %586 = vmatmul.mubr.f32.gmra.mrb[0].mxu0 %v100
    %v587 = vpop.f32.mrb[0].mxu0
    %v588 = vadd.f32 %v475, %v587
    %v589 = vpop.f32.mrb[0].mxu0
    %v590 = vadd.f32 %v477, %v589
    %591 = vmatprep.mubr.f32.mxu0 %v105
    %592 = vmatmul.mubr.f32.gmra.mrb[0].mxu0 %v104
    %v593 = vpop.f32.mrb[0].mxu0
    %v594 = vadd.f32 %v481, %v593
    %v595 = vpop.f32.mrb[0].mxu0
    %v596 = vadd.f32 %v483, %v595
    %597 = vmatprep.mubr.f32.mxu0 %v109
    %598 = vmatmul.mubr.f32.gmra.mrb[0].mxu0 %v108
    %v599 = vpop.f32.mrb[0].mxu0
    %v600 = vadd.f32 %v487, %v599
    %v601 = vpop.f32.mrb[0].mxu0
    %v602 = vadd.f32 %v489, %v601
    %603 = vmatprep.mubr.f32.mxu0 %v113
    %604 = vmatmul.mubr.f32.gmra.mrb[0].mxu0 %v112
    %v605 = vpop.f32.mrb[0].mxu0
    %v606 = vadd.f32 %v493, %v605
    %v607 = vpop.f32.mrb[0].mxu0
    %v608 = vadd.f32 %v495, %v607
    %609 = vmatprep.mubr.f32.mxu0 %v117
    %610 = vmatmul.mubr.f32.gmra.mrb[0].mxu0 %v116
    %v611 = vpop.f32.mrb[0].mxu0
    %v612 = vadd.f32 %v499, %v611
    %v613 = vpop.f32.mrb[0].mxu0
    %v614 = vadd.f32 %v501, %v613
    %615 = vmatprep.mubr.f32.mxu0 %v121
    %616 = vmatmul.mubr.f32.gmra.mrb[0].mxu0 %v120
    %v617 = vpop.f32.mrb[0].mxu0
    %v618 = vadd.f32 %v505, %v617
    %v619 = vpop.f32.mrb[0].mxu0
    %v620 = vadd.f32 %v507, %v619
    %621 = vmatprep.mubr.f32.mxu0 %v125
    %622 = vmatmul.mubr.f32.gmra.mrb[0].mxu0 %v124
    %v623 = vpop.f32.mrb[0].mxu0
    %v624 = vadd.f32 %v511, %v623
    %v625 = vpop.f32.mrb[0].mxu0
    %v626 = vadd.f32 %v513, %v625
    %627 = vmatprep.mubr.f32.mxu0 %v129
    %628 = vmatmul.mubr.f32.gmra.mrb[0].mxu0 %v128
    %v629 = vpop.f32.mrb[0].mxu0
    %v630 = vadd.f32 %v517, %v629
    %v631 = vpop.f32.mrb[0].mxu0
    %v632 = vadd.f32 %v519, %v631
    %633 = vdwg.mxu0
    %634 = vmatprep.subr.mxu0 %v133
    %635 = vmatpush1.msra.mxu0 %v132
    %636 = vmatprep.subr.mxu0 %v137
    %637 = vmatpush1.msra.mxu0 %v136
    %638 = vmatprep.subr.mxu0 %v141
    %639 = vmatpush1.msra.mxu0 %v140
    %640 = vmatprep.subr.mxu0 %v145
    %641 = vmatpush1.msra.mxu0 %v144
    %642 = vmatprep.subr.mxu0 %v149
    %643 = vmatpush1.msra.mxu0 %v148
    %644 = vmatprep.subr.mxu0 %v153
    %645 = vmatpush1.msra.mxu0 %v152
    %646 = vmatprep.subr.mxu0 %v157
    %647 = vmatpush1.msra.mxu0 %v156
    %648 = vmatprep.subr.mxu0 %v161
    %649 = vmatpush1.msra.mxu0 %v160
    %650 = vmatprep.subr.mxu0 %v165
    %651 = vmatpush1.msra.mxu0 %v164
    %652 = vmatprep.subr.mxu0 %v169
    %653 = vmatpush1.msra.mxu0 %v168
    %654 = vmatprep.subr.mxu0 %v173
    %655 = vmatpush1.msra.mxu0 %v172
    %656 = vmatprep.subr.mxu0 %v177
    %657 = vmatpush1.msra.mxu0 %v176
    %658 = vmatprep.subr.mxu0 %v181
    %659 = vmatpush1.msra.mxu0 %v180
    %660 = vmatprep.subr.mxu0 %v185
    %661 = vmatpush1.msra.mxu0 %v184
    %662 = vmatprep.subr.mxu0 %v189
    %663 = vmatpush1.msra.mxu0 %v188
    %664 = vmatprep.subr.mxu0 %v193
    %665 = vmatpush1.msra.mxu0 %v192
    %666 = vmatprep.subr.mxu0 %v197
    %667 = vmatpush1.msra.mxu0 %v196
    %668 = vmatprep.subr.mxu0 %v201
    %669 = vmatpush1.msra.mxu0 %v200
    %670 = vmatprep.subr.mxu0 %v205
    %671 = vmatpush1.msra.mxu0 %v204
    %672 = vmatprep.subr.mxu0 %v209
    %673 = vmatpush1.msra.mxu0 %v208
    %674 = vmatprep.subr.mxu0 %v213
    %675 = vmatpush1.msra.mxu0 %v212
    %676 = vmatprep.subr.mxu0 %v217
    %677 = vmatpush1.msra.mxu0 %v216
    %678 = vmatprep.subr.mxu0 %v221
    %679 = vmatpush1.msra.mxu0 %v220
    %680 = vmatprep.subr.mxu0 %v225
    %681 = vmatpush1.msra.mxu0 %v224
    %682 = vmatprep.subr.mxu0 %v229
    %683 = vmatpush1.msra.mxu0 %v228
    %684 = vmatprep.subr.mxu0 %v233
    %685 = vmatpush1.msra.mxu0 %v232
    %686 = vmatprep.subr.mxu0 %v237
    %687 = vmatpush1.msra.mxu0 %v236
    %688 = vmatprep.subr.mxu0 %v241
    %689 = vmatpush1.msra.mxu0 %v240
    %690 = vmatprep.subr.mxu0 %v245
    %691 = vmatpush1.msra.mxu0 %v244
    %692 = vmatprep.subr.mxu0 %v249
    %693 = vmatpush1.msra.mxu0 %v248
    %694 = vmatprep.subr.mxu0 %v253
    %695 = vmatpush1.msra.mxu0 %v252
    %696 = vmatprep.subr.mxu0 %v257
    %697 = vmatpush1.msra.mxu0 %v256
    %698 = vmatprep.mubr.f32.mxu0 %v99
    %699 = vmatmul.mubr.f32.gmra.mrb[0].mxu0 %v98
    %v700 = vpop.f32.mrb[0].mxu0
    %v701 = vadd.f32 %v399, %v700
    %v702 = vpop.f32.mrb[0].mxu0
    %v703 = vadd.f32 %v403, %v702
    %704 = vmatprep.mubr.f32.mxu0 %v103
    %705 = vmatmul.mubr.f32.gmra.mrb[0].mxu0 %v102
    %v706 = vpop.f32.mrb[0].mxu0
    %v707 = vadd.f32 %v399, %v706
    %v708 = vpop.f32.mrb[0].mxu0
    %v709 = vadd.f32 %v403, %v708
    %710 = vmatprep.mubr.f32.mxu0 %v107
    %711 = vmatmul.mubr.f32.gmra.mrb[0].mxu0 %v106
    %v712 = vpop.f32.mrb[0].mxu0
    %v713 = vadd.f32 %v399, %v712
    %v714 = vpop.f32.mrb[0].mxu0
    %v715 = vadd.f32 %v403, %v714
    %716 = vmatprep.mubr.f32.mxu0 %v111
    %717 = vmatmul.mubr.f32.gmra.mrb[0].mxu0 %v110
    %v718 = vpop.f32.mrb[0].mxu0
    %v719 = vadd.f32 %v399, %v718
    %v720 = vpop.f32.mrb[0].mxu0
    %v721 = vadd.f32 %v403, %v720
    %722 = vmatprep.mubr.f32.mxu0 %v115
    %723 = vmatmul.mubr.f32.gmra.mrb[0].mxu0 %v114
    %v724 = vpop.f32.mrb[0].mxu0
    %v725 = vadd.f32 %v399, %v724
    %v726 = vpop.f32.mrb[0].mxu0
    %v727 = vadd.f32 %v403, %v726
    %728 = vmatprep.mubr.f32.mxu0 %v119
    %729 = vmatmul.mubr.f32.gmra.mrb[0].mxu0 %v118
    %v730 = vpop.f32.mrb[0].mxu0
    %v731 = vadd.f32 %v399, %v730
    %v732 = vpop.f32.mrb[0].mxu0
    %v733 = vadd.f32 %v403, %v732
    %734 = vmatprep.mubr.f32.mxu0 %v123
    %735 = vmatmul.mubr.f32.gmra.mrb[0].mxu0 %v122
    %v736 = vpop.f32.mrb[0].mxu0
    %v737 = vadd.f32 %v399, %v736
    %v738 = vpop.f32.mrb[0].mxu0
    %v739 = vadd.f32 %v403, %v738
    %740 = vmatprep.mubr.f32.mxu0 %v127
    %741 = vmatmul.mubr.f32.gmra.mrb[0].mxu0 %v126
    %v742 = vpop.f32.mrb[0].mxu0
    %v743 = vadd.f32 %v399, %v742
    %v744 = vpop.f32.mrb[0].mxu0
    %v745 = vadd.f32 %v403, %v744
    %746 = vdwg.mxu0
    %747 = vmatprep.subr.mxu0 %v261
    %748 = vmatpush1.msra.mxu0 %v260
    %749 = vmatprep.subr.mxu0 %v265
    %750 = vmatpush1.msra.mxu0 %v264
    %751 = vmatprep.subr.mxu0 %v269
    %752 = vmatpush1.msra.mxu0 %v268
    %753 = vmatprep.subr.mxu0 %v273
    %754 = vmatpush1.msra.mxu0 %v272
    %755 = vmatprep.subr.mxu0 %v277
    %756 = vmatpush1.msra.mxu0 %v276
    %757 = vmatprep.subr.mxu0 %v281
    %758 = vmatpush1.msra.mxu0 %v280
    %759 = vmatprep.subr.mxu0 %v285
    %760 = vmatpush1.msra.mxu0 %v284
    %761 = vmatprep.subr.mxu0 %v289
    %762 = vmatpush1.msra.mxu0 %v288
    %763 = vmatprep.subr.mxu0 %v293
    %764 = vmatpush1.msra.mxu0 %v292
    %765 = vmatprep.subr.mxu0 %v297
    %766 = vmatpush1.msra.mxu0 %v296
    %767 = vmatprep.subr.mxu0 %v301
    %768 = vmatpush1.msra.mxu0 %v300
    %769 = vmatprep.subr.mxu0 %v305
    %770 = vmatpush1.msra.mxu0 %v304
    %771 = vmatprep.subr.mxu0 %v309
    %772 = vmatpush1.msra.mxu0 %v308
    %773 = vmatprep.subr.mxu0 %v313
    %774 = vmatpush1.msra.mxu0 %v312
    %775 = vmatprep.subr.mxu0 %v317
    %776 = vmatpush1.msra.mxu0 %v316
    %777 = vmatprep.subr.mxu0 %v321
    %778 = vmatpush1.msra.mxu0 %v320
    %779 = vmatprep.subr.mxu0 %v325
    %780 = vmatpush1.msra.mxu0 %v324
    %781 = vmatprep.subr.mxu0 %v329
    %782 = vmatpush1.msra.mxu0 %v328
    %783 = vmatprep.subr.mxu0 %v333
    %784 = vmatpush1.msra.mxu0 %v332
    %785 = vmatprep.subr.mxu0 %v337
    %786 = vmatpush1.msra.mxu0 %v336
    %787 = vmatprep.subr.mxu0 %v341
    %788 = vmatpush1.msra.mxu0 %v340
    %789 = vmatprep.subr.mxu0 %v345
    %790 = vmatpush1.msra.mxu0 %v344
    %791 = vmatprep.subr.mxu0 %v349
    %792 = vmatpush1.msra.mxu0 %v348
    %793 = vmatprep.subr.mxu0 %v353
    %794 = vmatpush1.msra.mxu0 %v352
    %795 = vmatprep.subr.mxu0 %v357
    %796 = vmatpush1.msra.mxu0 %v356
    %797 = vmatprep.subr.mxu0 %v361
    %798 = vmatpush1.msra.mxu0 %v360
    %799 = vmatprep.subr.mxu0 %v365
    %800 = vmatpush1.msra.mxu0 %v364
    %801 = vmatprep.subr.mxu0 %v369
    %802 = vmatpush1.msra.mxu0 %v368
    %803 = vmatprep.subr.mxu0 %v373
    %804 = vmatpush1.msra.mxu0 %v372
    %805 = vmatprep.subr.mxu0 %v377
    %806 = vmatpush1.msra.mxu0 %v376
    %807 = vmatprep.subr.mxu0 %v381
    %808 = vmatpush1.msra.mxu0 %v380
    %809 = vmatprep.subr.mxu0 %v385
    %810 = vmatpush1.msra.mxu0 %v384
    %811 = vmatprep.mubr.f32.mxu0 %v101
    %812 = vmatmul.mubr.f32.gmra.mrb[0].mxu0 %v100
    %v813 = vpop.f32.mrb[0].mxu0
    %v814 = vadd.f32 %v701, %v813
    %v815 = vpop.f32.mrb[0].mxu0
    %v816 = vadd.f32 %v703, %v815
    %817 = vmatprep.mubr.f32.mxu0 %v105
    %818 = vmatmul.mubr.f32.gmra.mrb[0].mxu0 %v104
    %v819 = vpop.f32.mrb[0].mxu0
    %v820 = vadd.f32 %v707, %v819
    %v821 = vpop.f32.mrb[0].mxu0
    %v822 = vadd.f32 %v709, %v821
    %823 = vmatprep.mubr.f32.mxu0 %v109
    %824 = vmatmul.mubr.f32.gmra.mrb[0].mxu0 %v108
    %v825 = vpop.f32.mrb[0].mxu0
    %v826 = vadd.f32 %v713, %v825
    %v827 = vpop.f32.mrb[0].mxu0
    %v828 = vadd.f32 %v715, %v827
    %829 = vmatprep.mubr.f32.mxu0 %v113
    %830 = vmatmul.mubr.f32.gmra.mrb[0].mxu0 %v112
    %v831 = vpop.f32.mrb[0].mxu0
    %v832 = vadd.f32 %v719, %v831
    %v833 = vpop.f32.mrb[0].mxu0
    %v834 = vadd.f32 %v721, %v833
    %835 = vmatprep.mubr.f32.mxu0 %v117
    %836 = vmatmul.mubr.f32.gmra.mrb[0].mxu0 %v116
    %v837 = vpop.f32.mrb[0].mxu0
    %v838 = vadd.f32 %v725, %v837
    %v839 = vpop.f32.mrb[0].mxu0
    %v840 = vadd.f32 %v727, %v839
    %841 = vmatprep.mubr.f32.mxu0 %v121
    %842 = vmatmul.mubr.f32.gmra.mrb[0].mxu0 %v120
    %v843 = vpop.f32.mrb[0].mxu0
    %v844 = vadd.f32 %v731, %v843
    %v845 = vpop.f32.mrb[0].mxu0
    %v846 = vadd.f32 %v733, %v845
    %847 = vmatprep.mubr.f32.mxu0 %v125
    %848 = vmatmul.mubr.f32.gmra.mrb[0].mxu0 %v124
    %v849 = vpop.f32.mrb[0].mxu0
    %v850 = vadd.f32 %v737, %v849
    %v851 = vpop.f32.mrb[0].mxu0
    %v852 = vadd.f32 %v739, %v851
    %853 = vmatprep.mubr.f32.mxu0 %v129
    %854 = vmatmul.mubr.f32.gmra.mrb[0].mxu0 %v128
    %v855 = vpop.f32.mrb[0].mxu0
    %v856 = vadd.f32 %v743, %v855
    %v857 = vpop.f32.mrb[0].mxu0
    %v858 = vadd.f32 %v745, %v857
    %859 = vdwg.mxu0
    %v860 = vmul.f32 %v588, 0.1
    %v861 = vmul.f32 %v590, 0.1
    %v862 = vmul.f32 %v814, 0.1
    %v863 = vmul.f32 %v816, 0.1
    %v864 = vmul.f32 %v594, 0.1
    %v865 = vmul.f32 %v596, 0.1
    %v866 = vmul.f32 %v820, 0.1
    %v867 = vmul.f32 %v822, 0.1
    %v868 = vmul.f32 %v600, 0.1
    %v869 = vmul.f32 %v602, 0.1
    %v870 = vmul.f32 %v826, 0.1
    %v871 = vmul.f32 %v828, 0.1
    %v872 = vmul.f32 %v606, 0.1
    %v873 = vmul.f32 %v608, 0.1
    %v874 = vmul.f32 %v832, 0.1
    %v875 = vmul.f32 %v834, 0.1
    %v876 = vmul.f32 %v612, 0.1
    %v877 = vmul.f32 %v614, 0.1
    %v878 = vmul.f32 %v838, 0.1
    %v879 = vmul.f32 %v840, 0.1
    %v880 = vmul.f32 %v618, 0.1
    %v881 = vmul.f32 %v620, 0.1
    %v882 = vmul.f32 %v844, 0.1
    %v883 = vmul.f32 %v846, 0.1
    %v884 = vmul.f32 %v624, 0.1
    %v885 = vmul.f32 %v626, 0.1
    %v886 = vmul.f32 %v850, 0.1
    %v887 = vmul.f32 %v852, 0.1
    %v888 = vmul.f32 %v630, 0.1
    %v889 = vmul.f32 %v632, 0.1
    %v890 = vmul.f32 %v856, 0.1
    %v891 = vmul.f32 %v858, 0.1
    %v892 = vmax.f32 %v588, %v860
    %v893 = vmax.f32 %v590, %v861
    %v894 = vmax.f32 %v814, %v862
    %v895 = vmax.f32 %v816, %v863
    %v896 = vmax.f32 %v594, %v864
    %v897 = vmax.f32 %v596, %v865
    %v898 = vmax.f32 %v820, %v866
    %v899 = vmax.f32 %v822, %v867
    %v900 = vmax.f32 %v600, %v868
    %v901 = vmax.f32 %v602, %v869
    %v902 = vmax.f32 %v826, %v870
    %v903 = vmax.f32 %v828, %v871
    %v904 = vmax.f32 %v606, %v872
    %v905 = vmax.f32 %v608, %v873
    %v906 = vmax.f32 %v832, %v874
    %v907 = vmax.f32 %v834, %v875
    %v908 = vmax.f32 %v612, %v876
    %v909 = vmax.f32 %v614, %v877
    %v910 = vmax.f32 %v838, %v878
    %v911 = vmax.f32 %v840, %v879
    %v912 = vmax.f32 %v618, %v880
    %v913 = vmax.f32 %v620, %v881
    %v914 = vmax.f32 %v844, %v882
    %v915 = vmax.f32 %v846, %v883
    %v916 = vmax.f32 %v624, %v884
    %v917 = vmax.f32 %v626, %v885
    %v918 = vmax.f32 %v850, %v886
    %v919 = vmax.f32 %v852, %v887
    %v920 = vmax.f32 %v630, %v888
    %v921 = vmax.f32 %v632, %v889
    %v922 = vmax.f32 %v856, %v890
    %v923 = vmax.f32 %v858, %v891
    %v924 = vld [vmem:[#allocation8] sm:$0xff]
    %v925 = vld [vmem:[#allocation8 + $0x8] sm:$0xff]
    %v926 = vld [vmem:[#allocation8 + $0x10] sm:$0xff]
    %v927 = vld [vmem:[#allocation8 + $0x18] sm:$0xff]
    %v928 = vld [vmem:[#allocation8 + $0x20] sm:$0xff]
    %v929 = vld [vmem:[#allocation8 + $0x28] sm:$0xff]
    %v930 = vld [vmem:[#allocation8 + $0x30] sm:$0xff]
    %v931 = vld [vmem:[#allocation8 + $0x38] sm:$0xff]
    %v932 = vld [vmem:[#allocation8 + $0x40] sm:$0xff]
    %v933 = vld [vmem:[#allocation8 + $0x48] sm:$0xff]
    %v934 = vld [vmem:[#allocation8 + $0x50] sm:$0xff]
    %v935 = vld [vmem:[#allocation8 + $0x58] sm:$0xff]
    %v936 = vld [vmem:[#allocation8 + $0x60] sm:$0xff]
    %v937 = vld [vmem:[#allocation8 + $0x68] sm:$0xff]
    %v938 = vld [vmem:[#allocation8 + $0x70] sm:$0xff]
    %v939 = vld [vmem:[#allocation8 + $0x78] sm:$0xff]
    %v940 = vld [vmem:[#allocation8 + $0x80] sm:$0xff]
    %v941 = vld [vmem:[#allocation8 + $0x88] sm:$0xff]
    %v942 = vld [vmem:[#allocation8 + $0x90] sm:$0xff]
    %v943 = vld [vmem:[#allocation8 + $0x98] sm:$0xff]
    %v944 = vld [vmem:[#allocation8 + $0xa0] sm:$0xff]
    %v945 = vld [vmem:[#allocation8 + $0xa8] sm:$0xff]
    %v946 = vld [vmem:[#allocation8 + $0xb0] sm:$0xff]
    %v947 = vld [vmem:[#allocation8 + $0xb8] sm:$0xff]
    %v948 = vld [vmem:[#allocation8 + $0xc0] sm:$0xff]
    %v949 = vld [vmem:[#allocation8 + $0xc8] sm:$0xff]
    %v950 = vld [vmem:[#allocation8 + $0xd0] sm:$0xff]
    %v951 = vld [vmem:[#allocation8 + $0xd8] sm:$0xff]
    %v952 = vld [vmem:[#allocation8 + $0xe0] sm:$0xff]
    %v953 = vld [vmem:[#allocation8 + $0xe8] sm:$0xff]
    %v954 = vld [vmem:[#allocation8 + $0xf0] sm:$0xff]
    %v955 = vld [vmem:[#allocation8 + $0xf8] sm:$0xff]
    %v956 = vld [vmem:[#allocation8 + $0x100] sm:$0xff]
    %v957 = vld [vmem:[#allocation8 + $0x108] sm:$0xff]
    %v958 = vld [vmem:[#allocation8 + $0x110] sm:$0xff]
    %v959 = vld [vmem:[#allocation8 + $0x118] sm:$0xff]
    %v960 = vld [vmem:[#allocation8 + $0x120] sm:$0xff]
    %v961 = vld [vmem:[#allocation8 + $0x128] sm:$0xff]
    %v962 = vld [vmem:[#allocation8 + $0x130] sm:$0xff]
    %v963 = vld [vmem:[#allocation8 + $0x138] sm:$0xff]
    %v964 = vld [vmem:[#allocation8 + $0x140] sm:$0xff]
    %v965 = vld [vmem:[#allocation8 + $0x148] sm:$0xff]
    %v966 = vld [vmem:[#allocation8 + $0x150] sm:$0xff]
    %v967 = vld [vmem:[#allocation8 + $0x158] sm:$0xff]
    %v968 = vld [vmem:[#allocation8 + $0x160] sm:$0xff]
    %v969 = vld [vmem:[#allocation8 + $0x168] sm:$0xff]
    %v970 = vld [vmem:[#allocation8 + $0x170] sm:$0xff]
    %v971 = vld [vmem:[#allocation8 + $0x178] sm:$0xff]
    %v972 = vld [vmem:[#allocation8 + $0x180] sm:$0xff]
    %v973 = vld [vmem:[#allocation8 + $0x188] sm:$0xff]
    %v974 = vld [vmem:[#allocation8 + $0x190] sm:$0xff]
    %v975 = vld [vmem:[#allocation8 + $0x198] sm:$0xff]
    %v976 = vld [vmem:[#allocation8 + $0x1a0] sm:$0xff]
    %v977 = vld [vmem:[#allocation8 + $0x1a8] sm:$0xff]
    %v978 = vld [vmem:[#allocation8 + $0x1b0] sm:$0xff]
    %v979 = vld [vmem:[#allocation8 + $0x1b8] sm:$0xff]
    %v980 = vld [vmem:[#allocation8 + $0x1c0] sm:$0xff]
    %v981 = vld [vmem:[#allocation8 + $0x1c8] sm:$0xff]
    %v982 = vld [vmem:[#allocation8 + $0x1d0] sm:$0xff]
    %v983 = vld [vmem:[#allocation8 + $0x1d8] sm:$0xff]
    %v984 = vld [vmem:[#allocation8 + $0x1e0] sm:$0xff]
    %v985 = vld [vmem:[#allocation8 + $0x1e8] sm:$0xff]
    %v986 = vld [vmem:[#allocation8 + $0x1f0] sm:$0xff]
    %v987 = vld [vmem:[#allocation8 + $0x1f8] sm:$0xff]
    %v988 = vld [vmem:[#allocation8 + $0x200] sm:$0xff]
    %v989 = vld [vmem:[#allocation8 + $0x208] sm:$0xff]
    %v990 = vld [vmem:[#allocation8 + $0x210] sm:$0xff]
    %v991 = vld [vmem:[#allocation8 + $0x218] sm:$0xff]
    %v992 = vld [vmem:[#allocation8 + $0x220] sm:$0xff]
    %v993 = vld [vmem:[#allocation8 + $0x228] sm:$0xff]
    %v994 = vld [vmem:[#allocation8 + $0x230] sm:$0xff]
    %v995 = vld [vmem:[#allocation8 + $0x238] sm:$0xff]
    %v996 = vld [vmem:[#allocation8 + $0x240] sm:$0xff]
    %v997 = vld [vmem:[#allocation8 + $0x248] sm:$0xff]
    %v998 = vld [vmem:[#allocation8 + $0x250] sm:$0xff]
    %v999 = vld [vmem:[#allocation8 + $0x258] sm:$0xff]
    %v1000 = vld [vmem:[#allocation8 + $0x260] sm:$0xff]
    %v1001 = vld [vmem:[#allocation8 + $0x268] sm:$0xff]
    %v1002 = vld [vmem:[#allocation8 + $0x270] sm:$0xff]
    %v1003 = vld [vmem:[#allocation8 + $0x278] sm:$0xff]
    %v1004 = vld [vmem:[#allocation8 + $0x280] sm:$0xff]
    %v1005 = vld [vmem:[#allocation8 + $0x288] sm:$0xff]
    %v1006 = vld [vmem:[#allocation8 + $0x290] sm:$0xff]
    %v1007 = vld [vmem:[#allocation8 + $0x298] sm:$0xff]
    %v1008 = vld [vmem:[#allocation8 + $0x2a0] sm:$0xff]
    %v1009 = vld [vmem:[#allocation8 + $0x2a8] sm:$0xff]
    %v1010 = vld [vmem:[#allocation8 + $0x2b0] sm:$0xff]
    %v1011 = vld [vmem:[#allocation8 + $0x2b8] sm:$0xff]
    %v1012 = vld [vmem:[#allocation8 + $0x2c0] sm:$0xff]
    %v1013 = vld [vmem:[#allocation8 + $0x2c8] sm:$0xff]
    %v1014 = vld [vmem:[#allocation8 + $0x2d0] sm:$0xff]
    %v1015 = vld [vmem:[#allocation8 + $0x2d8] sm:$0xff]
    %v1016 = vld [vmem:[#allocation8 + $0x2e0] sm:$0xff]
    %v1017 = vld [vmem:[#allocation8 + $0x2e8] sm:$0xff]
    %v1018 = vld [vmem:[#allocation8 + $0x2f0] sm:$0xff]
    %v1019 = vld [vmem:[#allocation8 + $0x2f8] sm:$0xff]
    %v1020 = vld [vmem:[#allocation8 + $0x300] sm:$0xff]
    %v1021 = vld [vmem:[#allocation8 + $0x308] sm:$0xff]
    %v1022 = vld [vmem:[#allocation8 + $0x310] sm:$0xff]
    %v1023 = vld [vmem:[#allocation8 + $0x318] sm:$0xff]
    %v1024 = vld [vmem:[#allocation8 + $0x320] sm:$0xff]
    %v1025 = vld [vmem:[#allocation8 + $0x328] sm:$0xff]
    %v1026 = vld [vmem:[#allocation8 + $0x330] sm:$0xff]
    %v1027 = vld [vmem:[#allocation8 + $0x338] sm:$0xff]
    %v1028 = vld [vmem:[#allocation8 + $0x340] sm:$0xff]
    %v1029 = vld [vmem:[#allocation8 + $0x348] sm:$0xff]
    %v1030 = vld [vmem:[#allocation8 + $0x350] sm:$0xff]
    %v1031 = vld [vmem:[#allocation8 + $0x358] sm:$0xff]
    %v1032 = vld [vmem:[#allocation8 + $0x360] sm:$0xff]
    %v1033 = vld [vmem:[#allocation8 + $0x368] sm:$0xff]
    %v1034 = vld [vmem:[#allocation8 + $0x370] sm:$0xff]
    %v1035 = vld [vmem:[#allocation8 + $0x378] sm:$0xff]
    %v1036 = vld [vmem:[#allocation8 + $0x380] sm:$0xff]
    %v1037 = vld [vmem:[#allocation8 + $0x388] sm:$0xff]
    %v1038 = vld [vmem:[#allocation8 + $0x390] sm:$0xff]
    %v1039 = vld [vmem:[#allocation8 + $0x398] sm:$0xff]
    %v1040 = vld [vmem:[#allocation8 + $0x3a0] sm:$0xff]
    %v1041 = vld [vmem:[#allocation8 + $0x3a8] sm:$0xff]
    %v1042 = vld [vmem:[#allocation8 + $0x3b0] sm:$0xff]
    %v1043 = vld [vmem:[#allocation8 + $0x3b8] sm:$0xff]
    %v1044 = vld [vmem:[#allocation8 + $0x3c0] sm:$0xff]
    %v1045 = vld [vmem:[#allocation8 + $0x3c8] sm:$0xff]
    %v1046 = vld [vmem:[#allocation8 + $0x3d0] sm:$0xff]
    %v1047 = vld [vmem:[#allocation8 + $0x3d8] sm:$0xff]
    %v1048 = vld [vmem:[#allocation8 + $0x3e0] sm:$0xff]
    %v1049 = vld [vmem:[#allocation8 + $0x3e8] sm:$0xff]
    %v1050 = vld [vmem:[#allocation8 + $0x3f0] sm:$0xff]
    %v1051 = vld [vmem:[#allocation8 + $0x3f8] sm:$0xff]
    %v1052 = vld [vmem:[#allocation8 + $0x400] sm:$0xff]
    %v1053 = vld [vmem:[#allocation8 + $0x408] sm:$0xff]
    %v1054 = vld [vmem:[#allocation8 + $0x410] sm:$0xff]
    %v1055 = vld [vmem:[#allocation8 + $0x418] sm:$0xff]
    %v1056 = vld [vmem:[#allocation8 + $0x420] sm:$0xff]
    %v1057 = vld [vmem:[#allocation8 + $0x428] sm:$0xff]
    %v1058 = vld [vmem:[#allocation8 + $0x430] sm:$0xff]
    %v1059 = vld [vmem:[#allocation8 + $0x438] sm:$0xff]
    %v1060 = vld [vmem:[#allocation8 + $0x440] sm:$0xff]
    %v1061 = vld [vmem:[#allocation8 + $0x448] sm:$0xff]
    %v1062 = vld [vmem:[#allocation8 + $0x450] sm:$0xff]
    %v1063 = vld [vmem:[#allocation8 + $0x458] sm:$0xff]
    %v1064 = vld [vmem:[#allocation8 + $0x460] sm:$0xff]
    %v1065 = vld [vmem:[#allocation8 + $0x468] sm:$0xff]
    %v1066 = vld [vmem:[#allocation8 + $0x470] sm:$0xff]
    %v1067 = vld [vmem:[#allocation8 + $0x478] sm:$0xff]
    %v1068 = vld [vmem:[#allocation8 + $0x480] sm:$0xff]
    %v1069 = vld [vmem:[#allocation8 + $0x488] sm:$0xff]
    %v1070 = vld [vmem:[#allocation8 + $0x490] sm:$0xff]
    %v1071 = vld [vmem:[#allocation8 + $0x498] sm:$0xff]
    %v1072 = vld [vmem:[#allocation8 + $0x4a0] sm:$0xff]
    %v1073 = vld [vmem:[#allocation8 + $0x4a8] sm:$0xff]
    %v1074 = vld [vmem:[#allocation8 + $0x4b0] sm:$0xff]
    %v1075 = vld [vmem:[#allocation8 + $0x4b8] sm:$0xff]
    %v1076 = vld [vmem:[#allocation8 + $0x4c0] sm:$0xff]
    %v1077 = vld [vmem:[#allocation8 + $0x4c8] sm:$0xff]
    %v1078 = vld [vmem:[#allocation8 + $0x4d0] sm:$0xff]
    %v1079 = vld [vmem:[#allocation8 + $0x4d8] sm:$0xff]
    %v1080 = vld [vmem:[#allocation8 + $0x4e0] sm:$0xff]
    %v1081 = vld [vmem:[#allocation8 + $0x4e8] sm:$0xff]
    %v1082 = vld [vmem:[#allocation8 + $0x4f0] sm:$0xff]
    %v1083 = vld [vmem:[#allocation8 + $0x4f8] sm:$0xff]
    %v1084 = vld [vmem:[#allocation8 + $0x500] sm:$0xff]
    %v1085 = vld [vmem:[#allocation8 + $0x508] sm:$0xff]
    %v1086 = vld [vmem:[#allocation8 + $0x510] sm:$0xff]
    %v1087 = vld [vmem:[#allocation8 + $0x518] sm:$0xff]
    %v1088 = vld [vmem:[#allocation8 + $0x520] sm:$0xff]
    %v1089 = vld [vmem:[#allocation8 + $0x528] sm:$0xff]
    %v1090 = vld [vmem:[#allocation8 + $0x530] sm:$0xff]
    %v1091 = vld [vmem:[#allocation8 + $0x538] sm:$0xff]
    %v1092 = vld [vmem:[#allocation8 + $0x540] sm:$0xff]
    %v1093 = vld [vmem:[#allocation8 + $0x548] sm:$0xff]
    %v1094 = vld [vmem:[#allocation8 + $0x550] sm:$0xff]
    %v1095 = vld [vmem:[#allocation8 + $0x558] sm:$0xff]
    %v1096 = vld [vmem:[#allocation8 + $0x560] sm:$0xff]
    %v1097 = vld [vmem:[#allocation8 + $0x568] sm:$0xff]
    %v1098 = vld [vmem:[#allocation8 + $0x570] sm:$0xff]
    %v1099 = vld [vmem:[#allocation8 + $0x578] sm:$0xff]
    %v1100 = vld [vmem:[#allocation8 + $0x580] sm:$0xff]
    %v1101 = vld [vmem:[#allocation8 + $0x588] sm:$0xff]
    %v1102 = vld [vmem:[#allocation8 + $0x590] sm:$0xff]
    %v1103 = vld [vmem:[#allocation8 + $0x598] sm:$0xff]
    %v1104 = vld [vmem:[#allocation8 + $0x5a0] sm:$0xff]
    %v1105 = vld [vmem:[#allocation8 + $0x5a8] sm:$0xff]
    %v1106 = vld [vmem:[#allocation8 + $0x5b0] sm:$0xff]
    %v1107 = vld [vmem:[#allocation8 + $0x5b8] sm:$0xff]
    %v1108 = vld [vmem:[#allocation8 + $0x5c0] sm:$0xff]
    %v1109 = vld [vmem:[#allocation8 + $0x5c8] sm:$0xff]
    %v1110 = vld [vmem:[#allocation8 + $0x5d0] sm:$0xff]
    %v1111 = vld [vmem:[#allocation8 + $0x5d8] sm:$0xff]
    %v1112 = vld [vmem:[#allocation8 + $0x5e0] sm:$0xff]
    %v1113 = vld [vmem:[#allocation8 + $0x5e8] sm:$0xff]
    %v1114 = vld [vmem:[#allocation8 + $0x5f0] sm:$0xff]
    %v1115 = vld [vmem:[#allocation8 + $0x5f8] sm:$0xff]
    %v1116 = vld [vmem:[#allocation8 + $0x600] sm:$0xff]
    %v1117 = vld [vmem:[#allocation8 + $0x608] sm:$0xff]
    %v1118 = vld [vmem:[#allocation8 + $0x610] sm:$0xff]
    %v1119 = vld [vmem:[#allocation8 + $0x618] sm:$0xff]
    %v1120 = vld [vmem:[#allocation8 + $0x620] sm:$0xff]
    %v1121 = vld [vmem:[#allocation8 + $0x628] sm:$0xff]
    %v1122 = vld [vmem:[#allocation8 + $0x630] sm:$0xff]
    %v1123 = vld [vmem:[#allocation8 + $0x638] sm:$0xff]
    %v1124 = vld [vmem:[#allocation8 + $0x640] sm:$0xff]
    %v1125 = vld [vmem:[#allocation8 + $0x648] sm:$0xff]
    %v1126 = vld [vmem:[#allocation8 + $0x650] sm:$0xff]
    %v1127 = vld [vmem:[#allocation8 + $0x658] sm:$0xff]
    %v1128 = vld [vmem:[#allocation8 + $0x660] sm:$0xff]
    %v1129 = vld [vmem:[#allocation8 + $0x668] sm:$0xff]
    %v1130 = vld [vmem:[#allocation8 + $0x670] sm:$0xff]
    %v1131 = vld [vmem:[#allocation8 + $0x678] sm:$0xff]
    %v1132 = vld [vmem:[#allocation8 + $0x680] sm:$0xff]
    %v1133 = vld [vmem:[#allocation8 + $0x688] sm:$0xff]
    %v1134 = vld [vmem:[#allocation8 + $0x690] sm:$0xff]
    %v1135 = vld [vmem:[#allocation8 + $0x698] sm:$0xff]
    %v1136 = vld [vmem:[#allocation8 + $0x6a0] sm:$0xff]
    %v1137 = vld [vmem:[#allocation8 + $0x6a8] sm:$0xff]
    %v1138 = vld [vmem:[#allocation8 + $0x6b0] sm:$0xff]
    %v1139 = vld [vmem:[#allocation8 + $0x6b8] sm:$0xff]
    %v1140 = vld [vmem:[#allocation8 + $0x6c0] sm:$0xff]
    %v1141 = vld [vmem:[#allocation8 + $0x6c8] sm:$0xff]
    %v1142 = vld [vmem:[#allocation8 + $0x6d0] sm:$0xff]
    %v1143 = vld [vmem:[#allocation8 + $0x6d8] sm:$0xff]
    %v1144 = vld [vmem:[#allocation8 + $0x6e0] sm:$0xff]
    %v1145 = vld [vmem:[#allocation8 + $0x6e8] sm:$0xff]
    %v1146 = vld [vmem:[#allocation8 + $0x6f0] sm:$0xff]
    %v1147 = vld [vmem:[#allocation8 + $0x6f8] sm:$0xff]
    %v1148 = vld [vmem:[#allocation8 + $0x700] sm:$0xff]
    %v1149 = vld [vmem:[#allocation8 + $0x708] sm:$0xff]
    %v1150 = vld [vmem:[#allocation8 + $0x710] sm:$0xff]
    %v1151 = vld [vmem:[#allocation8 + $0x718] sm:$0xff]
    %v1152 = vld [vmem:[#allocation8 + $0x720] sm:$0xff]
    %v1153 = vld [vmem:[#allocation8 + $0x728] sm:$0xff]
    %v1154 = vld [vmem:[#allocation8 + $0x730] sm:$0xff]
    %v1155 = vld [vmem:[#allocation8 + $0x738] sm:$0xff]
    %v1156 = vld [vmem:[#allocation8 + $0x740] sm:$0xff]
    %v1157 = vld [vmem:[#allocation8 + $0x748] sm:$0xff]
    %v1158 = vld [vmem:[#allocation8 + $0x750] sm:$0xff]
    %v1159 = vld [vmem:[#allocation8 + $0x758] sm:$0xff]
    %v1160 = vld [vmem:[#allocation8 + $0x760] sm:$0xff]
    %v1161 = vld [vmem:[#allocation8 + $0x768] sm:$0xff]
    %v1162 = vld [vmem:[#allocation8 + $0x770] sm:$0xff]
    %v1163 = vld [vmem:[#allocation8 + $0x778] sm:$0xff]
    %v1164 = vld [vmem:[#allocation8 + $0x780] sm:$0xff]
    %v1165 = vld [vmem:[#allocation8 + $0x788] sm:$0xff]
    %v1166 = vld [vmem:[#allocation8 + $0x790] sm:$0xff]
    %v1167 = vld [vmem:[#allocation8 + $0x798] sm:$0xff]
    %v1168 = vld [vmem:[#allocation8 + $0x7a0] sm:$0xff]
    %v1169 = vld [vmem:[#allocation8 + $0x7a8] sm:$0xff]
    %v1170 = vld [vmem:[#allocation8 + $0x7b0] sm:$0xff]
    %v1171 = vld [vmem:[#allocation8 + $0x7b8] sm:$0xff]
    %v1172 = vld [vmem:[#allocation8 + $0x7c0] sm:$0xff]
    %v1173 = vld [vmem:[#allocation8 + $0x7c8] sm:$0xff]
    %v1174 = vld [vmem:[#allocation8 + $0x7d0] sm:$0xff]
    %v1175 = vld [vmem:[#allocation8 + $0x7d8] sm:$0xff]
    %v1176 = vld [vmem:[#allocation8 + $0x7e0] sm:$0xff]
    %v1177 = vld [vmem:[#allocation8 + $0x7e8] sm:$0xff]
    %v1178 = vld [vmem:[#allocation8 + $0x7f0] sm:$0xff]
    %v1179 = vld [vmem:[#allocation8 + $0x7f8] sm:$0xff]
    %v1180 = vld [vmem:[%s5] sm:$0xf]
    %v1182 = vlaneseq
    %v1183 = vshrl.u32 %v1182, 7
    %v1184 = vsub.s32 0, %v1183
    %v1185 = vrot.slane %v1180, %v1184
    %v1186 = vlaneseq
    %v1187 = vshrl.u32 %v1186, 7
    %v1188 = vsub.s32 1, %v1187
    %v1189 = vrot.slane %v1180, %v1188
    %v1190 = vlaneseq
    %v1191 = vshrl.u32 %v1190, 7
    %v1192 = vsub.s32 2, %v1191
    %v1193 = vrot.slane %v1180, %v1192
    %v1194 = vlaneseq
    %v1195 = vshrl.u32 %v1194, 7
    %v1196 = vsub.s32 3, %v1195
    %v1197 = vrot.slane %v1180, %v1196
    %1202 = vmatprep.subr.mxu0 %v925
    %1203 = vmatpush1.msra.mxu0 %v924
    %1204 = vmatprep.subr.mxu0 %v929
    %1205 = vmatpush1.msra.mxu0 %v928
    %1206 = vmatprep.subr.mxu0 %v933
    %1207 = vmatpush1.msra.mxu0 %v932
    %1208 = vmatprep.subr.mxu0 %v937
    %1209 = vmatpush1.msra.mxu0 %v936
    %1210 = vmatprep.subr.mxu0 %v941
    %1211 = vmatpush1.msra.mxu0 %v940
    %1212 = vmatprep.subr.mxu0 %v945
    %1213 = vmatpush1.msra.mxu0 %v944
    %1214 = vmatprep.subr.mxu0 %v949
    %1215 = vmatpush1.msra.mxu0 %v948
    %1216 = vmatprep.subr.mxu0 %v953
    %1217 = vmatpush1.msra.mxu0 %v952
    %1218 = vmatprep.subr.mxu0 %v957
    %1219 = vmatpush1.msra.mxu0 %v956
    %1220 = vmatprep.subr.mxu0 %v961
    %1221 = vmatpush1.msra.mxu0 %v960
    %1222 = vmatprep.subr.mxu0 %v965
    %1223 = vmatpush1.msra.mxu0 %v964
    %1224 = vmatprep.subr.mxu0 %v969
    %1225 = vmatpush1.msra.mxu0 %v968
    %1226 = vmatprep.subr.mxu0 %v973
    %1227 = vmatpush1.msra.mxu0 %v972
    %1228 = vmatprep.subr.mxu0 %v977
    %1229 = vmatpush1.msra.mxu0 %v976
    %1230 = vmatprep.subr.mxu0 %v981
    %1231 = vmatpush1.msra.mxu0 %v980
    %1232 = vmatprep.subr.mxu0 %v985
    %1233 = vmatpush1.msra.mxu0 %v984
    %1234 = vmatprep.subr.mxu0 %v989
    %1235 = vmatpush1.msra.mxu0 %v988
    %1236 = vmatprep.subr.mxu0 %v993
    %1237 = vmatpush1.msra.mxu0 %v992
    %1238 = vmatprep.subr.mxu0 %v997
    %1239 = vmatpush1.msra.mxu0 %v996
    %1240 = vmatprep.subr.mxu0 %v1001
    %1241 = vmatpush1.msra.mxu0 %v1000
    %1242 = vmatprep.subr.mxu0 %v1005
    %1243 = vmatpush1.msra.mxu0 %v1004
    %1244 = vmatprep.subr.mxu0 %v1009
    %1245 = vmatpush1.msra.mxu0 %v1008
    %1246 = vmatprep.subr.mxu0 %v1013
    %1247 = vmatpush1.msra.mxu0 %v1012
    %1248 = vmatprep.subr.mxu0 %v1017
    %1249 = vmatpush1.msra.mxu0 %v1016
    %1250 = vmatprep.subr.mxu0 %v1021
    %1251 = vmatpush1.msra.mxu0 %v1020
    %1252 = vmatprep.subr.mxu0 %v1025
    %1253 = vmatpush1.msra.mxu0 %v1024
    %1254 = vmatprep.subr.mxu0 %v1029
    %1255 = vmatpush1.msra.mxu0 %v1028
    %1256 = vmatprep.subr.mxu0 %v1033
    %1257 = vmatpush1.msra.mxu0 %v1032
    %1258 = vmatprep.subr.mxu0 %v1037
    %1259 = vmatpush1.msra.mxu0 %v1036
    %1260 = vmatprep.subr.mxu0 %v1041
    %1261 = vmatpush1.msra.mxu0 %v1040
    %1262 = vmatprep.subr.mxu0 %v1045
    %1263 = vmatpush1.msra.mxu0 %v1044
    %1264 = vmatprep.subr.mxu0 %v1049
    %1265 = vmatpush1.msra.mxu0 %v1048
    %1266 = vmatprep.mubr.f32.mxu0 %v893
    %1267 = vmatmul.mubr.f32.gmra.mrb[0].mxu0 %v892
    %v1268 = vpop.f32.mrb[0].mxu0
    %v1269 = vadd.f32 %v1185, %v1268
    %v1270 = vpop.f32.mrb[0].mxu0
    %v1271 = vadd.f32 %v1189, %v1270
    %1272 = vmatprep.mubr.f32.mxu0 %v897
    %1273 = vmatmul.mubr.f32.gmra.mrb[0].mxu0 %v896
    %v1274 = vpop.f32.mrb[0].mxu0
    %v1275 = vadd.f32 %v1185, %v1274
    %v1276 = vpop.f32.mrb[0].mxu0
    %v1277 = vadd.f32 %v1189, %v1276
    %1278 = vmatprep.mubr.f32.mxu0 %v901
    %1279 = vmatmul.mubr.f32.gmra.mrb[0].mxu0 %v900
    %v1280 = vpop.f32.mrb[0].mxu0
    %v1281 = vadd.f32 %v1185, %v1280
    %v1282 = vpop.f32.mrb[0].mxu0
    %v1283 = vadd.f32 %v1189, %v1282
    %1284 = vmatprep.mubr.f32.mxu0 %v905
    %1285 = vmatmul.mubr.f32.gmra.mrb[0].mxu0 %v904
    %v1286 = vpop.f32.mrb[0].mxu0
    %v1287 = vadd.f32 %v1185, %v1286
    %v1288 = vpop.f32.mrb[0].mxu0
    %v1289 = vadd.f32 %v1189, %v1288
    %1290 = vmatprep.mubr.f32.mxu0 %v909
    %1291 = vmatmul.mubr.f32.gmra.mrb[0].mxu0 %v908
    %v1292 = vpop.f32.mrb[0].mxu0
    %v1293 = vadd.f32 %v1185, %v1292
    %v1294 = vpop.f32.mrb[0].mxu0
    %v1295 = vadd.f32 %v1189, %v1294
    %1296 = vmatprep.mubr.f32.mxu0 %v913
    %1297 = vmatmul.mubr.f32.gmra.mrb[0].mxu0 %v912
    %v1298 = vpop.f32.mrb[0].mxu0
    %v1299 = vadd.f32 %v1185, %v1298
    %v1300 = vpop.f32.mrb[0].mxu0
    %v1301 = vadd.f32 %v1189, %v1300
    %1302 = vmatprep.mubr.f32.mxu0 %v917
    %1303 = vmatmul.mubr.f32.gmra.mrb[0].mxu0 %v916
    %v1304 = vpop.f32.mrb[0].mxu0
    %v1305 = vadd.f32 %v1185, %v1304
    %v1306 = vpop.f32.mrb[0].mxu0
    %v1307 = vadd.f32 %v1189, %v1306
    %1308 = vmatprep.mubr.f32.mxu0 %v921
    %1309 = vmatmul.mubr.f32.gmra.mrb[0].mxu0 %v920
    %v1310 = vpop.f32.mrb[0].mxu0
    %v1311 = vadd.f32 %v1185, %v1310
    %v1312 = vpop.f32.mrb[0].mxu0
    %v1313 = vadd.f32 %v1189, %v1312
    %1314 = vdwg.mxu0
    %1315 = vmatprep.subr.mxu0 %v1053
    %1316 = vmatpush1.msra.mxu0 %v1052
    %1317 = vmatprep.subr.mxu0 %v1057
    %1318 = vmatpush1.msra.mxu0 %v1056
    %1319 = vmatprep.subr.mxu0 %v1061
    %1320 = vmatpush1.msra.mxu0 %v1060
    %1321 = vmatprep.subr.mxu0 %v1065
    %1322 = vmatpush1.msra.mxu0 %v1064
    %1323 = vmatprep.subr.mxu0 %v1069
    %1324 = vmatpush1.msra.mxu0 %v1068
    %1325 = vmatprep.subr.mxu0 %v1073
    %1326 = vmatpush1.msra.mxu0 %v1072
    %1327 = vmatprep.subr.mxu0 %v1077
    %1328 = vmatpush1.msra.mxu0 %v1076
    %1329 = vmatprep.subr.mxu0 %v1081
    %1330 = vmatpush1.msra.mxu0 %v1080
    %1331 = vmatprep.subr.mxu0 %v1085
    %1332 = vmatpush1.msra.mxu0 %v1084
    %1333 = vmatprep.subr.mxu0 %v1089
    %1334 = vmatpush1.msra.mxu0 %v1088
    %1335 = vmatprep.subr.mxu0 %v1093
    %1336 = vmatpush1.msra.mxu0 %v1092
    %1337 = vmatprep.subr.mxu0 %v1097
    %1338 = vmatpush1.msra.mxu0 %v1096
    %1339 = vmatprep.subr.mxu0 %v1101
    %1340 = vmatpush1.msra.mxu0 %v1100
    %1341 = vmatprep.subr.mxu0 %v1105
    %1342 = vmatpush1.msra.mxu0 %v1104
    %1343 = vmatprep.subr.mxu0 %v1109
    %1344 = vmatpush1.msra.mxu0 %v1108
    %1345 = vmatprep.subr.mxu0 %v1113
    %1346 = vmatpush1.msra.mxu0 %v1112
    %1347 = vmatprep.subr.mxu0 %v1117
    %1348 = vmatpush1.msra.mxu0 %v1116
    %1349 = vmatprep.subr.mxu0 %v1121
    %1350 = vmatpush1.msra.mxu0 %v1120
    %1351 = vmatprep.subr.mxu0 %v1125
    %1352 = vmatpush1.msra.mxu0 %v1124
    %1353 = vmatprep.subr.mxu0 %v1129
    %1354 = vmatpush1.msra.mxu0 %v1128
    %1355 = vmatprep.subr.mxu0 %v1133
    %1356 = vmatpush1.msra.mxu0 %v1132
    %1357 = vmatprep.subr.mxu0 %v1137
    %1358 = vmatpush1.msra.mxu0 %v1136
    %1359 = vmatprep.subr.mxu0 %v1141
    %1360 = vmatpush1.msra.mxu0 %v1140
    %1361 = vmatprep.subr.mxu0 %v1145
    %1362 = vmatpush1.msra.mxu0 %v1144
    %1363 = vmatprep.subr.mxu0 %v1149
    %1364 = vmatpush1.msra.mxu0 %v1148
    %1365 = vmatprep.subr.mxu0 %v1153
    %1366 = vmatpush1.msra.mxu0 %v1152
    %1367 = vmatprep.subr.mxu0 %v1157
    %1368 = vmatpush1.msra.mxu0 %v1156
    %1369 = vmatprep.subr.mxu0 %v1161
    %1370 = vmatpush1.msra.mxu0 %v1160
    %1371 = vmatprep.subr.mxu0 %v1165
    %1372 = vmatpush1.msra.mxu0 %v1164
    %1373 = vmatprep.subr.mxu0 %v1169
    %1374 = vmatpush1.msra.mxu0 %v1168
    %1375 = vmatprep.subr.mxu0 %v1173
    %1376 = vmatpush1.msra.mxu0 %v1172
    %1377 = vmatprep.subr.mxu0 %v1177
    %1378 = vmatpush1.msra.mxu0 %v1176
    %1379 = vmatprep.mubr.f32.mxu0 %v895
    %1380 = vmatmul.mubr.f32.gmra.mrb[0].mxu0 %v894
    %v1381 = vpop.f32.mrb[0].mxu0
    %v1382 = vadd.f32 %v1269, %v1381
    %v1383 = vpop.f32.mrb[0].mxu0
    %v1384 = vadd.f32 %v1271, %v1383
    %1385 = vmatprep.mubr.f32.mxu0 %v899
    %1386 = vmatmul.mubr.f32.gmra.mrb[0].mxu0 %v898
    %v1387 = vpop.f32.mrb[0].mxu0
    %v1388 = vadd.f32 %v1275, %v1387
    %v1389 = vpop.f32.mrb[0].mxu0
    %v1390 = vadd.f32 %v1277, %v1389
    %1391 = vmatprep.mubr.f32.mxu0 %v903
    %1392 = vmatmul.mubr.f32.gmra.mrb[0].mxu0 %v902
    %v1393 = vpop.f32.mrb[0].mxu0
    %v1394 = vadd.f32 %v1281, %v1393
    %v1395 = vpop.f32.mrb[0].mxu0
    %v1396 = vadd.f32 %v1283, %v1395
    %1397 = vmatprep.mubr.f32.mxu0 %v907
    %1398 = vmatmul.mubr.f32.gmra.mrb[0].mxu0 %v906
    %v1399 = vpop.f32.mrb[0].mxu0
    %v1400 = vadd.f32 %v1287, %v1399
    %v1401 = vpop.f32.mrb[0].mxu0
    %v1402 = vadd.f32 %v1289, %v1401
    %1403 = vmatprep.mubr.f32.mxu0 %v911
    %1404 = vmatmul.mubr.f32.gmra.mrb[0].mxu0 %v910
    %v1405 = vpop.f32.mrb[0].mxu0
    %v1406 = vadd.f32 %v1293, %v1405
    %v1407 = vpop.f32.mrb[0].mxu0
    %v1408 = vadd.f32 %v1295, %v1407
    %1409 = vmatprep.mubr.f32.mxu0 %v915
    %1410 = vmatmul.mubr.f32.gmra.mrb[0].mxu0 %v914
    %v1411 = vpop.f32.mrb[0].mxu0
    %v1412 = vadd.f32 %v1299, %v1411
    %v1413 = vpop.f32.mrb[0].mxu0
    %v1414 = vadd.f32 %v1301, %v1413
    %1415 = vmatprep.mubr.f32.mxu0 %v919
    %1416 = vmatmul.mubr.f32.gmra.mrb[0].mxu0 %v918
    %v1417 = vpop.f32.mrb[0].mxu0
    %v1418 = vadd.f32 %v1305, %v1417
    %v1419 = vpop.f32.mrb[0].mxu0
    %v1420 = vadd.f32 %v1307, %v1419
    %1421 = vmatprep.mubr.f32.mxu0 %v923
    %1422 = vmatmul.mubr.f32.gmra.mrb[0].mxu0 %v922
    %v1423 = vpop.f32.mrb[0].mxu0
    %v1424 = vadd.f32 %v1311, %v1423
    %v1425 = vpop.f32.mrb[0].mxu0
    %v1426 = vadd.f32 %v1313, %v1425
    %1427 = vdwg.mxu0
    %1428 = vmatprep.subr.mxu0 %v927
    %1429 = vmatpush1.msra.mxu0 %v926
    %1430 = vmatprep.subr.mxu0 %v931
    %1431 = vmatpush1.msra.mxu0 %v930
    %1432 = vmatprep.subr.mxu0 %v935
    %1433 = vmatpush1.msra.mxu0 %v934
    %1434 = vmatprep.subr.mxu0 %v939
    %1435 = vmatpush1.msra.mxu0 %v938
    %1436 = vmatprep.subr.mxu0 %v943
    %1437 = vmatpush1.msra.mxu0 %v942
    %1438 = vmatprep.subr.mxu0 %v947
    %1439 = vmatpush1.msra.mxu0 %v946
    %1440 = vmatprep.subr.mxu0 %v951
    %1441 = vmatpush1.msra.mxu0 %v950
    %1442 = vmatprep.subr.mxu0 %v955
    %1443 = vmatpush1.msra.mxu0 %v954
    %1444 = vmatprep.subr.mxu0 %v959
    %1445 = vmatpush1.msra.mxu0 %v958
    %1446 = vmatprep.subr.mxu0 %v963
    %1447 = vmatpush1.msra.mxu0 %v962
    %1448 = vmatprep.subr.mxu0 %v967
    %1449 = vmatpush1.msra.mxu0 %v966
    %1450 = vmatprep.subr.mxu0 %v971
    %1451 = vmatpush1.msra.mxu0 %v970
    %1452 = vmatprep.subr.mxu0 %v975
    %1453 = vmatpush1.msra.mxu0 %v974
    %1454 = vmatprep.subr.mxu0 %v979
    %1455 = vmatpush1.msra.mxu0 %v978
    %1456 = vmatprep.subr.mxu0 %v983
    %1457 = vmatpush1.msra.mxu0 %v982
    %1458 = vmatprep.subr.mxu0 %v987
    %1459 = vmatpush1.msra.mxu0 %v986
    %1460 = vmatprep.subr.mxu0 %v991
    %1461 = vmatpush1.msra.mxu0 %v990
    %1462 = vmatprep.subr.mxu0 %v995
    %1463 = vmatpush1.msra.mxu0 %v994
    %1464 = vmatprep.subr.mxu0 %v999
    %1465 = vmatpush1.msra.mxu0 %v998
    %1466 = vmatprep.subr.mxu0 %v1003
    %1467 = vmatpush1.msra.mxu0 %v1002
    %1468 = vmatprep.subr.mxu0 %v1007
    %1469 = vmatpush1.msra.mxu0 %v1006
    %1470 = vmatprep.subr.mxu0 %v1011
    %1471 = vmatpush1.msra.mxu0 %v1010
    %1472 = vmatprep.subr.mxu0 %v1015
    %1473 = vmatpush1.msra.mxu0 %v1014
    %1474 = vmatprep.subr.mxu0 %v1019
    %1475 = vmatpush1.msra.mxu0 %v1018
    %1476 = vmatprep.subr.mxu0 %v1023
    %1477 = vmatpush1.msra.mxu0 %v1022
    %1478 = vmatprep.subr.mxu0 %v1027
    %1479 = vmatpush1.msra.mxu0 %v1026
    %1480 = vmatprep.subr.mxu0 %v1031
    %1481 = vmatpush1.msra.mxu0 %v1030
    %1482 = vmatprep.subr.mxu0 %v1035
    %1483 = vmatpush1.msra.mxu0 %v1034
    %1484 = vmatprep.subr.mxu0 %v1039
    %1485 = vmatpush1.msra.mxu0 %v1038
    %1486 = vmatprep.subr.mxu0 %v1043
    %1487 = vmatpush1.msra.mxu0 %v1042
    %1488 = vmatprep.subr.mxu0 %v1047
    %1489 = vmatpush1.msra.mxu0 %v1046
    %1490 = vmatprep.subr.mxu0 %v1051
    %1491 = vmatpush1.msra.mxu0 %v1050
    %1492 = vmatprep.mubr.f32.mxu0 %v893
    %1493 = vmatmul.mubr.f32.gmra.mrb[0].mxu0 %v892
    %v1494 = vpop.f32.mrb[0].mxu0
    %v1495 = vadd.f32 %v1193, %v1494
    %v1496 = vpop.f32.mrb[0].mxu0
    %v1497 = vadd.f32 %v1197, %v1496
    %1498 = vmatprep.mubr.f32.mxu0 %v897
    %1499 = vmatmul.mubr.f32.gmra.mrb[0].mxu0 %v896
    %v1500 = vpop.f32.mrb[0].mxu0
    %v1501 = vadd.f32 %v1193, %v1500
    %v1502 = vpop.f32.mrb[0].mxu0
    %v1503 = vadd.f32 %v1197, %v1502
    %1504 = vmatprep.mubr.f32.mxu0 %v901
    %1505 = vmatmul.mubr.f32.gmra.mrb[0].mxu0 %v900
    %v1506 = vpop.f32.mrb[0].mxu0
    %v1507 = vadd.f32 %v1193, %v1506
    %v1508 = vpop.f32.mrb[0].mxu0
    %v1509 = vadd.f32 %v1197, %v1508
    %1510 = vmatprep.mubr.f32.mxu0 %v905
    %1511 = vmatmul.mubr.f32.gmra.mrb[0].mxu0 %v904
    %v1512 = vpop.f32.mrb[0].mxu0
    %v1513 = vadd.f32 %v1193, %v1512
    %v1514 = vpop.f32.mrb[0].mxu0
    %v1515 = vadd.f32 %v1197, %v1514
    %1516 = vmatprep.mubr.f32.mxu0 %v909
    %1517 = vmatmul.mubr.f32.gmra.mrb[0].mxu0 %v908
    %v1518 = vpop.f32.mrb[0].mxu0
    %v1519 = vadd.f32 %v1193, %v1518
    %v1520 = vpop.f32.mrb[0].mxu0
    %v1521 = vadd.f32 %v1197, %v1520
    %1522 = vmatprep.mubr.f32.mxu0 %v913
    %1523 = vmatmul.mubr.f32.gmra.mrb[0].mxu0 %v912
    %v1524 = vpop.f32.mrb[0].mxu0
    %v1525 = vadd.f32 %v1193, %v1524
    %v1526 = vpop.f32.mrb[0].mxu0
    %v1527 = vadd.f32 %v1197, %v1526
    %1528 = vmatprep.mubr.f32.mxu0 %v917
    %1529 = vmatmul.mubr.f32.gmra.mrb[0].mxu0 %v916
    %v1530 = vpop.f32.mrb[0].mxu0
    %v1531 = vadd.f32 %v1193, %v1530
    %v1532 = vpop.f32.mrb[0].mxu0
    %v1533 = vadd.f32 %v1197, %v1532
    %1534 = vmatprep.mubr.f32.mxu0 %v921
    %1535 = vmatmul.mubr.f32.gmra.mrb[0].mxu0 %v920
    %v1536 = vpop.f32.mrb[0].mxu0
    %v1537 = vadd.f32 %v1193, %v1536
    %v1538 = vpop.f32.mrb[0].mxu0
    %v1539 = vadd.f32 %v1197, %v1538
    %1540 = vdwg.mxu0
    %1541 = vmatprep.subr.mxu0 %v1055
    %1542 = vmatpush1.msra.mxu0 %v1054
    %1543 = vmatprep.subr.mxu0 %v1059
    %1544 = vmatpush1.msra.mxu0 %v1058
    %1545 = vmatprep.subr.mxu0 %v1063
    %1546 = vmatpush1.msra.mxu0 %v1062
    %1547 = vmatprep.subr.mxu0 %v1067
    %1548 = vmatpush1.msra.mxu0 %v1066
    %1549 = vmatprep.subr.mxu0 %v1071
    %1550 = vmatpush1.msra.mxu0 %v1070
    %1551 = vmatprep.subr.mxu0 %v1075
    %1552 = vmatpush1.msra.mxu0 %v1074
    %1553 = vmatprep.subr.mxu0 %v1079
    %1554 = vmatpush1.msra.mxu0 %v1078
    %1555 = vmatprep.subr.mxu0 %v1083
    %1556 = vmatpush1.msra.mxu0 %v1082
    %1557 = vmatprep.subr.mxu0 %v1087
    %1558 = vmatpush1.msra.mxu0 %v1086
    %1559 = vmatprep.subr.mxu0 %v1091
    %1560 = vmatpush1.msra.mxu0 %v1090
    %1561 = vmatprep.subr.mxu0 %v1095
    %1562 = vmatpush1.msra.mxu0 %v1094
    %1563 = vmatprep.subr.mxu0 %v1099
    %1564 = vmatpush1.msra.mxu0 %v1098
    %1565 = vmatprep.subr.mxu0 %v1103
    %1566 = vmatpush1.msra.mxu0 %v1102
    %1567 = vmatprep.subr.mxu0 %v1107
    %1568 = vmatpush1.msra.mxu0 %v1106
    %1569 = vmatprep.subr.mxu0 %v1111
    %1570 = vmatpush1.msra.mxu0 %v1110
    %1571 = vmatprep.subr.mxu0 %v1115
    %1572 = vmatpush1.msra.mxu0 %v1114
    %1573 = vmatprep.subr.mxu0 %v1119
    %1574 = vmatpush1.msra.mxu0 %v1118
    %1575 = vmatprep.subr.mxu0 %v1123
    %1576 = vmatpush1.msra.mxu0 %v1122
    %1577 = vmatprep.subr.mxu0 %v1127
    %1578 = vmatpush1.msra.mxu0 %v1126
    %1579 = vmatprep.subr.mxu0 %v1131
    %1580 = vmatpush1.msra.mxu0 %v1130
    %1581 = vmatprep.subr.mxu0 %v1135
    %1582 = vmatpush1.msra.mxu0 %v1134
    %1583 = vmatprep.subr.mxu0 %v1139
    %1584 = vmatpush1.msra.mxu0 %v1138
    %1585 = vmatprep.subr.mxu0 %v1143
    %1586 = vmatpush1.msra.mxu0 %v1142
    %1587 = vmatprep.subr.mxu0 %v1147
    %1588 = vmatpush1.msra.mxu0 %v1146
    %1589 = vmatprep.subr.mxu0 %v1151
    %1590 = vmatpush1.msra.mxu0 %v1150
    %1591 = vmatprep.subr.mxu0 %v1155
    %1592 = vmatpush1.msra.mxu0 %v1154
    %1593 = vmatprep.subr.mxu0 %v1159
    %1594 = vmatpush1.msra.mxu0 %v1158
    %1595 = vmatprep.subr.mxu0 %v1163
    %1596 = vmatpush1.msra.mxu0 %v1162
    %1597 = vmatprep.subr.mxu0 %v1167
    %1598 = vmatpush1.msra.mxu0 %v1166
    %1599 = vmatprep.subr.mxu0 %v1171
    %1600 = vmatpush1.msra.mxu0 %v1170
    %1601 = vmatprep.subr.mxu0 %v1175
    %1602 = vmatpush1.msra.mxu0 %v1174
    %1603 = vmatprep.subr.mxu0 %v1179
    %1604 = vmatpush1.msra.mxu0 %v1178
    %1605 = vmatprep.mubr.f32.mxu0 %v895
    %1606 = vmatmul.mubr.f32.gmra.mrb[0].mxu0 %v894
    %v1607 = vpop.f32.mrb[0].mxu0
    %v1608 = vadd.f32 %v1495, %v1607
    %v1609 = vpop.f32.mrb[0].mxu0
    %v1610 = vadd.f32 %v1497, %v1609
    %1611 = vmatprep.mubr.f32.mxu0 %v899
    %1612 = vmatmul.mubr.f32.gmra.mrb[0].mxu0 %v898
    %v1613 = vpop.f32.mrb[0].mxu0
    %v1614 = vadd.f32 %v1501, %v1613
    %v1615 = vpop.f32.mrb[0].mxu0
    %v1616 = vadd.f32 %v1503, %v1615
    %1617 = vmatprep.mubr.f32.mxu0 %v903
    %1618 = vmatmul.mubr.f32.gmra.mrb[0].mxu0 %v902
    %v1619 = vpop.f32.mrb[0].mxu0
    %v1620 = vadd.f32 %v1507, %v1619
    %v1621 = vpop.f32.mrb[0].mxu0
    %v1622 = vadd.f32 %v1509, %v1621
    %1623 = vmatprep.mubr.f32.mxu0 %v907
    %1624 = vmatmul.mubr.f32.gmra.mrb[0].mxu0 %v906
    %v1625 = vpop.f32.mrb[0].mxu0
    %v1626 = vadd.f32 %v1513, %v1625
    %v1627 = vpop.f32.mrb[0].mxu0
    %v1628 = vadd.f32 %v1515, %v1627
    %1629 = vmatprep.mubr.f32.mxu0 %v911
    %1630 = vmatmul.mubr.f32.gmra.mrb[0].mxu0 %v910
    %v1631 = vpop.f32.mrb[0].mxu0
    %v1632 = vadd.f32 %v1519, %v1631
    %v1633 = vpop.f32.mrb[0].mxu0
    %v1634 = vadd.f32 %v1521, %v1633
    %1635 = vmatprep.mubr.f32.mxu0 %v915
    %1636 = vmatmul.mubr.f32.gmra.mrb[0].mxu0 %v914
    %v1637 = vpop.f32.mrb[0].mxu0
    %v1638 = vadd.f32 %v1525, %v1637
    %v1639 = vpop.f32.mrb[0].mxu0
    %v1640 = vadd.f32 %v1527, %v1639
    %1641 = vmatprep.mubr.f32.mxu0 %v919
    %1642 = vmatmul.mubr.f32.gmra.mrb[0].mxu0 %v918
    %v1643 = vpop.f32.mrb[0].mxu0
    %v1644 = vadd.f32 %v1531, %v1643
    %v1645 = vpop.f32.mrb[0].mxu0
    %v1646 = vadd.f32 %v1533, %v1645
    %1647 = vmatprep.mubr.f32.mxu0 %v923
    %1648 = vmatmul.mubr.f32.gmra.mrb[0].mxu0 %v922
    %v1649 = vpop.f32.mrb[0].mxu0
    %v1650 = vadd.f32 %v1537, %v1649
    %v1651 = vpop.f32.mrb[0].mxu0
    %v1652 = vadd.f32 %v1539, %v1651
    %1653 = vdwg.mxu0
    %v1654 = vmul.f32 %v1382, 0.1
    %v1655 = vmul.f32 %v1384, 0.1
    %v1656 = vmul.f32 %v1608, 0.1
    %v1657 = vmul.f32 %v1610, 0.1
    %v1658 = vmul.f32 %v1388, 0.1
    %v1659 = vmul.f32 %v1390, 0.1
    %v1660 = vmul.f32 %v1614, 0.1
    %v1661 = vmul.f32 %v1616, 0.1
    %v1662 = vmul.f32 %v1394, 0.1
    %v1663 = vmul.f32 %v1396, 0.1
    %v1664 = vmul.f32 %v1620, 0.1
    %v1665 = vmul.f32 %v1622, 0.1
    %v1666 = vmul.f32 %v1400, 0.1
    %v1667 = vmul.f32 %v1402, 0.1
    %v1668 = vmul.f32 %v1626, 0.1
    %v1669 = vmul.f32 %v1628, 0.1
    %v1670 = vmul.f32 %v1406, 0.1
    %v1671 = vmul.f32 %v1408, 0.1
    %v1672 = vmul.f32 %v1632, 0.1
    %v1673 = vmul.f32 %v1634, 0.1
    %v1674 = vmul.f32 %v1412, 0.1
    %v1675 = vmul.f32 %v1414, 0.1
    %v1676 = vmul.f32 %v1638, 0.1
    %v1677 = vmul.f32 %v1640, 0.1
    %v1678 = vmul.f32 %v1418, 0.1
    %v1679 = vmul.f32 %v1420, 0.1
    %v1680 = vmul.f32 %v1644, 0.1
    %v1681 = vmul.f32 %v1646, 0.1
    %v1682 = vmul.f32 %v1424, 0.1
    %v1683 = vmul.f32 %v1426, 0.1
    %v1684 = vmul.f32 %v1650, 0.1
    %v1685 = vmul.f32 %v1652, 0.1
    %v1686 = vmax.f32 %v1382, %v1654
    %v1687 = vmax.f32 %v1384, %v1655
    %v1688 = vmax.f32 %v1608, %v1656
    %v1689 = vmax.f32 %v1610, %v1657
    %v1690 = vmax.f32 %v1388, %v1658
    %v1691 = vmax.f32 %v1390, %v1659
    %v1692 = vmax.f32 %v1614, %v1660
    %v1693 = vmax.f32 %v1616, %v1661
    %v1694 = vmax.f32 %v1394, %v1662
    %v1695 = vmax.f32 %v1396, %v1663
    %v1696 = vmax.f32 %v1620, %v1664
    %v1697 = vmax.f32 %v1622, %v1665
    %v1698 = vmax.f32 %v1400, %v1666
    %v1699 = vmax.f32 %v1402, %v1667
    %v1700 = vmax.f32 %v1626, %v1668
    %v1701 = vmax.f32 %v1628, %v1669
    %v1702 = vmax.f32 %v1406, %v1670
    %v1703 = vmax.f32 %v1408, %v1671
    %v1704 = vmax.f32 %v1632, %v1672
    %v1705 = vmax.f32 %v1634, %v1673
    %v1706 = vmax.f32 %v1412, %v1674
    %v1707 = vmax.f32 %v1414, %v1675
    %v1708 = vmax.f32 %v1638, %v1676
    %v1709 = vmax.f32 %v1640, %v1677
    %v1710 = vmax.f32 %v1418, %v1678
    %v1711 = vmax.f32 %v1420, %v1679
    %v1712 = vmax.f32 %v1644, %v1680
    %v1713 = vmax.f32 %v1646, %v1681
    %v1714 = vmax.f32 %v1424, %v1682
    %v1715 = vmax.f32 %v1426, %v1683
    %v1716 = vmax.f32 %v1650, %v1684
    %v1717 = vmax.f32 %v1652, %v1685
    %v1718 = vld [vmem:[#allocation5] sm:$0xff]
    %v1719 = vld [vmem:[#allocation5 + $0x8] sm:$0xff]
    %v1720 = vld [vmem:[#allocation5 + $0x10] sm:$0xff]
    %v1721 = vld [vmem:[#allocation5 + $0x18] sm:$0xff]
    %v1722 = vld [vmem:[#allocation5 + $0x20] sm:$0xff]
    %v1723 = vld [vmem:[#allocation5 + $0x28] sm:$0xff]
    %v1724 = vld [vmem:[#allocation5 + $0x30] sm:$0xff]
    %v1725 = vld [vmem:[#allocation5 + $0x38] sm:$0xff]
    %v1726 = vlaneseq
    %v1727 = vshrl.u32 %v1726, 7
    %v1728 = vadd.s32 %v1727, 8
    %v1729 = vadd.s32 %v1727, 16
    %v1730 = vadd.s32 %v1727, 24
    %v1731 = vadd.s32 %v1727, 32
    %v1732 = vadd.s32 %v1727, 40
    %v1733 = vadd.s32 %v1727, 48
    %v1734 = vadd.s32 %v1727, 56
    %v1735 = vlaneseq
    %v1736 = vand.u32 %v1735, 127
    %vm1737 = vcmp.eq.s32.totalorder %v1727, %v1736
    %vm1738 = vcmp.eq.s32.totalorder %v1728, %v1736
    %vm1739 = vcmp.eq.s32.totalorder %v1729, %v1736
    %vm1740 = vcmp.eq.s32.totalorder %v1730, %v1736
    %vm1741 = vcmp.eq.s32.totalorder %v1731, %v1736
    %vm1742 = vcmp.eq.s32.totalorder %v1732, %v1736
    %vm1743 = vcmp.eq.s32.totalorder %v1733, %v1736
    %vm1744 = vcmp.eq.s32.totalorder %v1734, %v1736
    %v1745 = vmul.f32 %v1718, -99.0
    %v1746 = vmul.f32 %v1719, -99.0
    %v1747 = vmul.f32 %v1720, -99.0
    %v1748 = vmul.f32 %v1721, -99.0
    %v1749 = vmul.f32 %v1722, -99.0
    %v1750 = vmul.f32 %v1723, -99.0
    %v1751 = vmul.f32 %v1724, -99.0
    %v1752 = vmul.f32 %v1725, -99.0
    %v1753 = vsel %vm1737, %v1745, %v1718
    %v1754 = vsel %vm1738, %v1746, %v1719
    %v1755 = vsel %vm1739, %v1747, %v1720
    %v1756 = vsel %vm1740, %v1748, %v1721
    %v1757 = vsel %vm1741, %v1749, %v1722
    %v1758 = vsel %vm1742, %v1750, %v1723
    %v1759 = vsel %vm1743, %v1751, %v1724
    %v1760 = vsel %vm1744, %v1752, %v1725
    %v1761 = vand.u32 %v1727, 7
    %v1762 = vand.u32 %v1728, 7
    %v1763 = vand.u32 %v1729, 7
    %v1764 = vand.u32 %v1730, 7
    %v1765 = vand.u32 %v1731, 7
    %v1766 = vand.u32 %v1732, 7
    %v1767 = vand.u32 %v1733, 7
    %v1768 = vand.u32 %v1734, 7
    %v1769 = vsub.s32 %v1727, %v1761
    %v1770 = vsub.s32 %v1728, %v1762
    %v1771 = vsub.s32 %v1729, %v1763
    %v1772 = vsub.s32 %v1730, %v1764
    %v1773 = vsub.s32 %v1731, %v1765
    %v1774 = vsub.s32 %v1732, %v1766
    %v1775 = vsub.s32 %v1733, %v1767
    %v1776 = vsub.s32 %v1734, %v1768
    %v1777 = vand.u32 %v1736, 7
    %v1778 = vsub.s32 %v1736, %v1777
    %vm1779 = vcmp.eq.s32.totalorder %v1769, %v1778
    %vm1780 = vcmp.eq.s32.totalorder %v1770, %v1778
    %vm1781 = vcmp.eq.s32.totalorder %v1771, %v1778
    %vm1782 = vcmp.eq.s32.totalorder %v1772, %v1778
    %vm1783 = vcmp.eq.s32.totalorder %v1773, %v1778
    %vm1784 = vcmp.eq.s32.totalorder %v1774, %v1778
    %vm1785 = vcmp.eq.s32.totalorder %v1775, %v1778
    %vm1786 = vcmp.eq.s32.totalorder %v1776, %v1778
    %v1787 = vsel %vm1779, %v1753, -1e+30
    %v1788 = vsel %vm1780, %v1754, -1e+30
    %v1789 = vsel %vm1781, %v1755, -1e+30
    %v1790 = vsel %vm1782, %v1756, -1e+30
    %v1791 = vsel %vm1783, %v1757, -1e+30
    %v1792 = vsel %vm1784, %v1758, -1e+30
    %v1793 = vsel %vm1785, %v1759, -1e+30
    %v1794 = vsel %vm1786, %v1760, -1e+30
    %vm1795 = vcmask 523264
    %v1796 = vsel %vm1795, %v1787, -inf
    %1797 = vmax.xlane.f32.xlu0 %v1796
    %v1798 = vpop.xlane.xlu0 %1797
    %v1799 = vsel %vm1795, %v1788, -inf
    %1800 = vmax.xlane.f32.xlu0 %v1799
    %v1801 = vpop.xlane.xlu0 %1800
    %v1802 = vsel %vm1795, %v1789, -inf
    %1803 = vmax.xlane.f32.xlu0 %v1802
    %v1804 = vpop.xlane.xlu0 %1803
    %v1805 = vsel %vm1795, %v1790, -inf
    %1806 = vmax.xlane.f32.xlu0 %v1805
    %v1807 = vpop.xlane.xlu0 %1806
    %v1808 = vsel %vm1795, %v1791, -inf
    %1809 = vmax.xlane.f32.xlu0 %v1808
    %v1810 = vpop.xlane.xlu0 %1809
    %v1811 = vsel %vm1795, %v1792, -inf
    %1812 = vmax.xlane.f32.xlu0 %v1811
    %v1813 = vpop.xlane.xlu0 %1812
    %v1814 = vsel %vm1795, %v1793, -inf
    %1815 = vmax.xlane.f32.xlu0 %v1814
    %v1816 = vpop.xlane.xlu0 %1815
    %v1817 = vsel %vm1795, %v1794, -inf
    %1818 = vmax.xlane.f32.xlu0 %v1817
    %v1819 = vpop.xlane.xlu0 %1818
    %v1820 = vsub.f32 %v1787, %v1798
    %v1821 = vsub.f32 %v1788, %v1801
    %v1822 = vsub.f32 %v1789, %v1804
    %v1823 = vsub.f32 %v1790, %v1807
    %v1824 = vsub.f32 %v1791, %v1810
    %v1825 = vsub.f32 %v1792, %v1813
    %v1826 = vsub.f32 %v1793, %v1816
    %v1827 = vsub.f32 %v1794, %v1819
    %v1828 = vmul.f32 %v1820, 1.442695
    %v1829 = vpow.pop %v1828
    %v1830 = vmul.f32 %v1821, 1.442695
    %v1831 = vpow.pop %v1830
    %v1832 = vmul.f32 %v1822, 1.442695
    %v1833 = vpow.pop %v1832
    %v1834 = vmul.f32 %v1823, 1.442695
    %v1835 = vpow.pop %v1834
    %v1836 = vmul.f32 %v1824, 1.442695
    %v1837 = vpow.pop %v1836
    %v1838 = vmul.f32 %v1825, 1.442695
    %v1839 = vpow.pop %v1838
    %v1840 = vmul.f32 %v1826, 1.442695
    %v1841 = vpow.pop %v1840
    %v1842 = vmul.f32 %v1827, 1.442695
    %v1843 = vpow.pop %v1842
    %v1844 = vsel %vm1795, %v1829, 0.0
    %1845 = vadd.xlane.f32.xlu0 %v1844
    %v1846 = vpop.xlane.xlu0 %1845
    %v1847 = vsel %vm1795, %v1831, 0.0
    %1848 = vadd.xlane.f32.xlu0 %v1847
    %v1849 = vpop.xlane.xlu0 %1848
    %v1850 = vsel %vm1795, %v1833, 0.0
    %1851 = vadd.xlane.f32.xlu0 %v1850
    %v1852 = vpop.xlane.xlu0 %1851
    %v1853 = vsel %vm1795, %v1835, 0.0
    %1854 = vadd.xlane.f32.xlu0 %v1853
    %v1855 = vpop.xlane.xlu0 %1854
    %v1856 = vsel %vm1795, %v1837, 0.0
    %1857 = vadd.xlane.f32.xlu0 %v1856
    %v1858 = vpop.xlane.xlu0 %1857
    %v1859 = vsel %vm1795, %v1839, 0.0
    %1860 = vadd.xlane.f32.xlu0 %v1859
    %v1861 = vpop.xlane.xlu0 %1860
    %v1862 = vsel %vm1795, %v1841, 0.0
    %1863 = vadd.xlane.f32.xlu0 %v1862
    %v1864 = vpop.xlane.xlu0 %1863
    %v1865 = vsel %vm1795, %v1843, 0.0
    %1866 = vadd.xlane.f32.xlu0 %v1865
    %v1867 = vpop.xlane.xlu0 %1866
    %v1868 = vrcp.pop %v1846
    %v1869 = vmul.f32 %v1829, %v1868
    %v1870 = vrcp.pop %v1849
    %v1871 = vmul.f32 %v1831, %v1870
    %v1872 = vrcp.pop %v1852
    %v1873 = vmul.f32 %v1833, %v1872
    %v1874 = vrcp.pop %v1855
    %v1875 = vmul.f32 %v1835, %v1874
    %v1876 = vrcp.pop %v1858
    %v1877 = vmul.f32 %v1837, %v1876
    %v1878 = vrcp.pop %v1861
    %v1879 = vmul.f32 %v1839, %v1878
    %v1880 = vrcp.pop %v1864
    %v1881 = vmul.f32 %v1841, %v1880
    %v1882 = vrcp.pop %v1867
    %v1883 = vmul.f32 %v1843, %v1882
    %v1885 = vsel %vm1795, %v1869, 0
    %v1888 = vsel %vm1795, %v1871, 0
    %v1891 = vsel %vm1795, %v1873, 0
    %v1894 = vsel %vm1795, %v1875, 0
    %v1897 = vsel %vm1795, %v1877, 0
    %v1900 = vsel %vm1795, %v1879, 0
    %v1903 = vsel %vm1795, %v1881, 0
    %v1906 = vsel %vm1795, %v1883, 0
    %1908 = vmatprep.subr.mxu0 %v1687
    %1909 = vmatpush1.msra.mxu0 %v1686
    %1910 = vmatprep.subr.mxu0 %v1691
    %1911 = vmatpush1.msra.mxu0 %v1690
    %1912 = vmatprep.subr.mxu0 %v1695
    %1913 = vmatpush1.msra.mxu0 %v1694
    %1914 = vmatprep.subr.mxu0 %v1699
    %1915 = vmatpush1.msra.mxu0 %v1698
    %1916 = vmatprep.subr.mxu0 %v1703
    %1917 = vmatpush1.msra.mxu0 %v1702
    %1918 = vmatprep.subr.mxu0 %v1707
    %1919 = vmatpush1.msra.mxu0 %v1706
    %1920 = vmatprep.subr.mxu0 %v1711
    %1921 = vmatpush1.msra.mxu0 %v1710
    %1922 = vmatprep.subr.mxu0 %v1715
    %1923 = vmatpush1.msra.mxu0 %v1714
    %1924 = vmatprep.subr.mxu0 0.0
    %1925 = vmatpush1.msra.mxu0 0.0
    %1926 = vmatprep.subr.mxu0 0.0
    %1927 = vmatpush1.msra.mxu0 0.0
    %1928 = vmatprep.subr.mxu0 0.0
    %1929 = vmatpush1.msra.mxu0 0.0
    %1930 = vmatprep.subr.mxu0 0.0
    %1931 = vmatpush1.msra.mxu0 0.0
    %1932 = vmatprep.subr.mxu0 0.0
    %1933 = vmatpush1.msra.mxu0 0.0
    %1934 = vmatprep.subr.mxu0 0.0
    %1935 = vmatpush1.msra.mxu0 0.0
    %1936 = vmatprep.subr.mxu0 0.0
    %1937 = vmatpush1.msra.mxu0 0.0
    %1938 = vmatprep.subr.mxu0 0.0
    %1939 = vmatpush1.msra.mxu0 0.0
    %1940 = vmatprep.subr.mxu0 0.0
    %1941 = vmatpush1.msra.mxu0 0.0
    %1942 = vmatprep.subr.mxu0 0.0
    %1943 = vmatpush1.msra.mxu0 0.0
    %1944 = vmatprep.subr.mxu0 0.0
    %1945 = vmatpush1.msra.mxu0 0.0
    %1946 = vmatprep.subr.mxu0 0.0
    %1947 = vmatpush1.msra.mxu0 0.0
    %1948 = vmatprep.subr.mxu0 0.0
    %1949 = vmatpush1.msra.mxu0 0.0
    %1950 = vmatprep.subr.mxu0 0.0
    %1951 = vmatpush1.msra.mxu0 0.0
    %1952 = vmatprep.subr.mxu0 0.0
    %1953 = vmatpush1.msra.mxu0 0.0
    %1954 = vmatprep.subr.mxu0 0.0
    %1955 = vmatpush1.msra.mxu0 0.0
    %1956 = vmatprep.subr.mxu0 0.0
    %1957 = vmatpush1.msra.mxu0 0.0
    %1958 = vmatprep.subr.mxu0 0.0
    %1959 = vmatpush1.msra.mxu0 0.0
    %1960 = vmatprep.subr.mxu0 0.0
    %1961 = vmatpush1.msra.mxu0 0.0
    %1962 = vmatprep.subr.mxu0 0.0
    %1963 = vmatpush1.msra.mxu0 0.0
    %1964 = vmatprep.subr.mxu0 0.0
    %1965 = vmatpush1.msra.mxu0 0.0
    %1966 = vmatprep.subr.mxu0 0.0
    %1967 = vmatpush1.msra.mxu0 0.0
    %1968 = vmatprep.subr.mxu0 0.0
    %1969 = vmatpush1.msra.mxu0 0.0
    %1970 = vmatprep.subr.mxu0 0.0
    %1971 = vmatpush1.msra.mxu0 0.0
    %1972 = vmatprep.mubr.f32.mxu0 0.0
    %1973 = vmatmul.mubr.f32.gmra.mrb[0].mxu0 %v1885
    %v1974 = vpop.f32.mrb[0].mxu0
    %v1975 = vadd.f32 0.0, %v1974
    %v1976 = vpop.f32.mrb[0].mxu0
    %v1977 = vadd.f32 0.0, %v1976
    %1978 = vmatprep.mubr.f32.mxu0 0.0
    %1979 = vmatmul.mubr.f32.gmra.mrb[0].mxu0 %v1888
    %v1980 = vpop.f32.mrb[0].mxu0
    %v1981 = vadd.f32 0.0, %v1980
    %v1982 = vpop.f32.mrb[0].mxu0
    %v1983 = vadd.f32 0.0, %v1982
    %1984 = vmatprep.mubr.f32.mxu0 0.0
    %1985 = vmatmul.mubr.f32.gmra.mrb[0].mxu0 %v1891
    %v1986 = vpop.f32.mrb[0].mxu0
    %v1987 = vadd.f32 0.0, %v1986
    %v1988 = vpop.f32.mrb[0].mxu0
    %v1989 = vadd.f32 0.0, %v1988
    %1990 = vmatprep.mubr.f32.mxu0 0.0
    %1991 = vmatmul.mubr.f32.gmra.mrb[0].mxu0 %v1894
    %v1992 = vpop.f32.mrb[0].mxu0
    %v1993 = vadd.f32 0.0, %v1992
    %v1994 = vpop.f32.mrb[0].mxu0
    %v1995 = vadd.f32 0.0, %v1994
    %1996 = vmatprep.mubr.f32.mxu0 0.0
    %1997 = vmatmul.mubr.f32.gmra.mrb[0].mxu0 %v1897
    %v1998 = vpop.f32.mrb[0].mxu0
    %v1999 = vadd.f32 0.0, %v1998
    %v2000 = vpop.f32.mrb[0].mxu0
    %v2001 = vadd.f32 0.0, %v2000
    %2002 = vmatprep.mubr.f32.mxu0 0.0
    %2003 = vmatmul.mubr.f32.gmra.mrb[0].mxu0 %v1900
    %v2004 = vpop.f32.mrb[0].mxu0
    %v2005 = vadd.f32 0.0, %v2004
    %v2006 = vpop.f32.mrb[0].mxu0
    %v2007 = vadd.f32 0.0, %v2006
    %2008 = vmatprep.mubr.f32.mxu0 0.0
    %2009 = vmatmul.mubr.f32.gmra.mrb[0].mxu0 %v1903
    %v2010 = vpop.f32.mrb[0].mxu0
    %v2011 = vadd.f32 0.0, %v2010
    %v2012 = vpop.f32.mrb[0].mxu0
    %v2013 = vadd.f32 0.0, %v2012
    %2014 = vmatprep.mubr.f32.mxu0 0.0
    %2015 = vmatmul.mubr.f32.gmra.mrb[0].mxu0 %v1906
    %v2016 = vpop.f32.mrb[0].mxu0
    %v2017 = vadd.f32 0.0, %v2016
    %v2018 = vpop.f32.mrb[0].mxu0
    %v2019 = vadd.f32 0.0, %v2018
    %2020 = vdwg.mxu0
    %2021 = vmatprep.subr.mxu0 %v1689
    %2022 = vmatpush1.msra.mxu0 %v1688
    %2023 = vmatprep.subr.mxu0 %v1693
    %2024 = vmatpush1.msra.mxu0 %v1692
    %2025 = vmatprep.subr.mxu0 %v1697
    %2026 = vmatpush1.msra.mxu0 %v1696
    %2027 = vmatprep.subr.mxu0 %v1701
    %2028 = vmatpush1.msra.mxu0 %v1700
    %2029 = vmatprep.subr.mxu0 %v1705
    %2030 = vmatpush1.msra.mxu0 %v1704
    %2031 = vmatprep.subr.mxu0 %v1709
    %2032 = vmatpush1.msra.mxu0 %v1708
    %2033 = vmatprep.subr.mxu0 %v1713
    %2034 = vmatpush1.msra.mxu0 %v1712
    %2035 = vmatprep.subr.mxu0 %v1717
    %2036 = vmatpush1.msra.mxu0 %v1716
    %2037 = vmatprep.subr.mxu0 0.0
    %2038 = vmatpush1.msra.mxu0 0.0
    %2039 = vmatprep.subr.mxu0 0.0
    %2040 = vmatpush1.msra.mxu0 0.0
    %2041 = vmatprep.subr.mxu0 0.0
    %2042 = vmatpush1.msra.mxu0 0.0
    %2043 = vmatprep.subr.mxu0 0.0
    %2044 = vmatpush1.msra.mxu0 0.0
    %2045 = vmatprep.subr.mxu0 0.0
    %2046 = vmatpush1.msra.mxu0 0.0
    %2047 = vmatprep.subr.mxu0 0.0
    %2048 = vmatpush1.msra.mxu0 0.0
    %2049 = vmatprep.subr.mxu0 0.0
    %2050 = vmatpush1.msra.mxu0 0.0
    %2051 = vmatprep.subr.mxu0 0.0
    %2052 = vmatpush1.msra.mxu0 0.0
    %2053 = vmatprep.subr.mxu0 0.0
    %2054 = vmatpush1.msra.mxu0 0.0
    %2055 = vmatprep.subr.mxu0 0.0
    %2056 = vmatpush1.msra.mxu0 0.0
    %2057 = vmatprep.subr.mxu0 0.0
    %2058 = vmatpush1.msra.mxu0 0.0
    %2059 = vmatprep.subr.mxu0 0.0
    %2060 = vmatpush1.msra.mxu0 0.0
    %2061 = vmatprep.subr.mxu0 0.0
    %2062 = vmatpush1.msra.mxu0 0.0
    %2063 = vmatprep.subr.mxu0 0.0
    %2064 = vmatpush1.msra.mxu0 0.0
    %2065 = vmatprep.subr.mxu0 0.0
    %2066 = vmatpush1.msra.mxu0 0.0
    %2067 = vmatprep.subr.mxu0 0.0
    %2068 = vmatpush1.msra.mxu0 0.0
    %2069 = vmatprep.subr.mxu0 0.0
    %2070 = vmatpush1.msra.mxu0 0.0
    %2071 = vmatprep.subr.mxu0 0.0
    %2072 = vmatpush1.msra.mxu0 0.0
    %2073 = vmatprep.subr.mxu0 0.0
    %2074 = vmatpush1.msra.mxu0 0.0
    %2075 = vmatprep.subr.mxu0 0.0
    %2076 = vmatpush1.msra.mxu0 0.0
    %2077 = vmatprep.subr.mxu0 0.0
    %2078 = vmatpush1.msra.mxu0 0.0
    %2079 = vmatprep.subr.mxu0 0.0
    %2080 = vmatpush1.msra.mxu0 0.0
    %2081 = vmatprep.subr.mxu0 0.0
    %2082 = vmatpush1.msra.mxu0 0.0
    %2083 = vmatprep.subr.mxu0 0.0
    %2084 = vmatpush1.msra.mxu0 0.0
    %2085 = vmatprep.mubr.f32.mxu0 0.0
    %2086 = vmatmul.mubr.f32.gmra.mrb[0].mxu0 %v1885
    %v2087 = vpop.f32.mrb[0].mxu0
    %v2088 = vadd.f32 0.0, %v2087
    %v2089 = vpop.f32.mrb[0].mxu0
    %v2090 = vadd.f32 0.0, %v2089
    %2091 = vmatprep.mubr.f32.mxu0 0.0
    %2092 = vmatmul.mubr.f32.gmra.mrb[0].mxu0 %v1888
    %v2093 = vpop.f32.mrb[0].mxu0
    %v2094 = vadd.f32 0.0, %v2093
    %v2095 = vpop.f32.mrb[0].mxu0
    %v2096 = vadd.f32 0.0, %v2095
    %2097 = vmatprep.mubr.f32.mxu0 0.0
    %2098 = vmatmul.mubr.f32.gmra.mrb[0].mxu0 %v1891
    %v2099 = vpop.f32.mrb[0].mxu0
    %v2100 = vadd.f32 0.0, %v2099
    %v2101 = vpop.f32.mrb[0].mxu0
    %v2102 = vadd.f32 0.0, %v2101
    %2103 = vmatprep.mubr.f32.mxu0 0.0
    %2104 = vmatmul.mubr.f32.gmra.mrb[0].mxu0 %v1894
    %v2105 = vpop.f32.mrb[0].mxu0
    %v2106 = vadd.f32 0.0, %v2105
    %v2107 = vpop.f32.mrb[0].mxu0
    %v2108 = vadd.f32 0.0, %v2107
    %2109 = vmatprep.mubr.f32.mxu0 0.0
    %2110 = vmatmul.mubr.f32.gmra.mrb[0].mxu0 %v1897
    %v2111 = vpop.f32.mrb[0].mxu0
    %v2112 = vadd.f32 0.0, %v2111
    %v2113 = vpop.f32.mrb[0].mxu0
    %v2114 = vadd.f32 0.0, %v2113
    %2115 = vmatprep.mubr.f32.mxu0 0.0
    %2116 = vmatmul.mubr.f32.gmra.mrb[0].mxu0 %v1900
    %v2117 = vpop.f32.mrb[0].mxu0
    %v2118 = vadd.f32 0.0, %v2117
    %v2119 = vpop.f32.mrb[0].mxu0
    %v2120 = vadd.f32 0.0, %v2119
    %2121 = vmatprep.mubr.f32.mxu0 0.0
    %2122 = vmatmul.mubr.f32.gmra.mrb[0].mxu0 %v1903
    %v2123 = vpop.f32.mrb[0].mxu0
    %v2124 = vadd.f32 0.0, %v2123
    %v2125 = vpop.f32.mrb[0].mxu0
    %v2126 = vadd.f32 0.0, %v2125
    %2127 = vmatprep.mubr.f32.mxu0 0.0
    %2128 = vmatmul.mubr.f32.gmra.mrb[0].mxu0 %v1906
    %v2129 = vpop.f32.mrb[0].mxu0
    %v2130 = vadd.f32 0.0, %v2129
    %v2131 = vpop.f32.mrb[0].mxu0
    %v2132 = vadd.f32 0.0, %v2131
    %2133 = vdwg.mxu0
    %v2134 = vmul.f32 %v1975, 0.9
    %v2135 = vmul.f32 %v1977, 0.9
    %v2136 = vmul.f32 %v2088, 0.9
    %v2137 = vmul.f32 %v2090, 0.9
    %v2138 = vmul.f32 %v1981, 0.9
    %v2139 = vmul.f32 %v1983, 0.9
    %v2140 = vmul.f32 %v2094, 0.9
    %v2141 = vmul.f32 %v2096, 0.9
    %v2142 = vmul.f32 %v1987, 0.9
    %v2143 = vmul.f32 %v1989, 0.9
    %v2144 = vmul.f32 %v2100, 0.9
    %v2145 = vmul.f32 %v2102, 0.9
    %v2146 = vmul.f32 %v1993, 0.9
    %v2147 = vmul.f32 %v1995, 0.9
    %v2148 = vmul.f32 %v2106, 0.9
    %v2149 = vmul.f32 %v2108, 0.9
    %v2150 = vmul.f32 %v1999, 0.9
    %v2151 = vmul.f32 %v2001, 0.9
    %v2152 = vmul.f32 %v2112, 0.9
    %v2153 = vmul.f32 %v2114, 0.9
    %v2154 = vmul.f32 %v2005, 0.9
    %v2155 = vmul.f32 %v2007, 0.9
    %v2156 = vmul.f32 %v2118, 0.9
    %v2157 = vmul.f32 %v2120, 0.9
    %v2158 = vmul.f32 %v2011, 0.9
    %v2159 = vmul.f32 %v2013, 0.9
    %v2160 = vmul.f32 %v2124, 0.9
    %v2161 = vmul.f32 %v2126, 0.9
    %v2162 = vmul.f32 %v2017, 0.9
    %v2163 = vmul.f32 %v2019, 0.9
    %v2164 = vmul.f32 %v2130, 0.9
    %v2165 = vmul.f32 %v2132, 0.9
    %v2166 = vmul.f32 %v98, 0.1
    %v2167 = vmul.f32 %v99, 0.1
    %v2168 = vmul.f32 %v100, 0.1
    %v2169 = vmul.f32 %v101, 0.1
    %v2170 = vmul.f32 %v102, 0.1
    %v2171 = vmul.f32 %v103, 0.1
    %v2172 = vmul.f32 %v104, 0.1
    %v2173 = vmul.f32 %v105, 0.1
    %v2174 = vmul.f32 %v106, 0.1
    %v2175 = vmul.f32 %v107, 0.1
    %v2176 = vmul.f32 %v108, 0.1
    %v2177 = vmul.f32 %v109, 0.1
    %v2178 = vmul.f32 %v110, 0.1
    %v2179 = vmul.f32 %v111, 0.1
    %v2180 = vmul.f32 %v112, 0.1
    %v2181 = vmul.f32 %v113, 0.1
    %v2182 = vmul.f32 %v114, 0.1
    %v2183 = vmul.f32 %v115, 0.1
    %v2184 = vmul.f32 %v116, 0.1
    %v2185 = vmul.f32 %v117, 0.1
    %v2186 = vmul.f32 %v118, 0.1
    %v2187 = vmul.f32 %v119, 0.1
    %v2188 = vmul.f32 %v120, 0.1
    %v2189 = vmul.f32 %v121, 0.1
    %v2190 = vmul.f32 %v122, 0.1
    %v2191 = vmul.f32 %v123, 0.1
    %v2192 = vmul.f32 %v124, 0.1
    %v2193 = vmul.f32 %v125, 0.1
    %v2194 = vmul.f32 %v126, 0.1
    %v2195 = vmul.f32 %v127, 0.1
    %v2196 = vmul.f32 %v128, 0.1
    %v2197 = vmul.f32 %v129, 0.1
    %v2198 = vadd.f32 %v2134, %v2166
    %v2199 = vadd.f32 %v2135, %v2167
    %v2200 = vadd.f32 %v2136, %v2168
    %v2201 = vadd.f32 %v2137, %v2169
    %v2202 = vadd.f32 %v2138, %v2170
    %v2203 = vadd.f32 %v2139, %v2171
    %v2204 = vadd.f32 %v2140, %v2172
    %v2205 = vadd.f32 %v2141, %v2173
    %v2206 = vadd.f32 %v2142, %v2174
    %v2207 = vadd.f32 %v2143, %v2175
    %v2208 = vadd.f32 %v2144, %v2176
    %v2209 = vadd.f32 %v2145, %v2177
    %v2210 = vadd.f32 %v2146, %v2178
    %v2211 = vadd.f32 %v2147, %v2179
    %v2212 = vadd.f32 %v2148, %v2180
    %v2213 = vadd.f32 %v2149, %v2181
    %v2214 = vadd.f32 %v2150, %v2182
    %v2215 = vadd.f32 %v2151, %v2183
    %v2216 = vadd.f32 %v2152, %v2184
    %v2217 = vadd.f32 %v2153, %v2185
    %v2218 = vadd.f32 %v2154, %v2186
    %v2219 = vadd.f32 %v2155, %v2187
    %v2220 = vadd.f32 %v2156, %v2188
    %v2221 = vadd.f32 %v2157, %v2189
    %v2222 = vadd.f32 %v2158, %v2190
    %v2223 = vadd.f32 %v2159, %v2191
    %v2224 = vadd.f32 %v2160, %v2192
    %v2225 = vadd.f32 %v2161, %v2193
    %v2226 = vadd.f32 %v2162, %v2194
    %v2227 = vadd.f32 %v2163, %v2195
    %v2228 = vadd.f32 %v2164, %v2196
    %v2229 = vadd.f32 %v2165, %v2197
    %v2230 = vld [vmem:[#allocation10] sm:$0xff]
    %v2231 = vld [vmem:[#allocation10 + $0x8] sm:$0xff]
    %v2232 = vld [vmem:[#allocation10 + $0x10] sm:$0xff]
    %v2233 = vld [vmem:[#allocation10 + $0x18] sm:$0xff]
    %v2234 = vld [vmem:[#allocation10 + $0x20] sm:$0xff]
    %v2235 = vld [vmem:[#allocation10 + $0x28] sm:$0xff]
    %v2236 = vld [vmem:[#allocation10 + $0x30] sm:$0xff]
    %v2237 = vld [vmem:[#allocation10 + $0x38] sm:$0xff]
    %v2238 = vld [vmem:[#allocation10 + $0x40] sm:$0xff]
    %v2239 = vld [vmem:[#allocation10 + $0x48] sm:$0xff]
    %v2240 = vld [vmem:[#allocation10 + $0x50] sm:$0xff]
    %v2241 = vld [vmem:[#allocation10 + $0x58] sm:$0xff]
    %v2242 = vld [vmem:[#allocation10 + $0x60] sm:$0xff]
    %v2243 = vld [vmem:[#allocation10 + $0x68] sm:$0xff]
    %v2244 = vld [vmem:[#allocation10 + $0x70] sm:$0xff]
    %v2245 = vld [vmem:[#allocation10 + $0x78] sm:$0xff]
    %v2246 = vld [vmem:[#allocation10 + $0x80] sm:$0xff]
    %v2247 = vld [vmem:[#allocation10 + $0x88] sm:$0xff]
    %v2248 = vld [vmem:[#allocation10 + $0x90] sm:$0xff]
    %v2249 = vld [vmem:[#allocation10 + $0x98] sm:$0xff]
    %v2250 = vld [vmem:[#allocation10 + $0xa0] sm:$0xff]
    %v2251 = vld [vmem:[#allocation10 + $0xa8] sm:$0xff]
    %v2252 = vld [vmem:[#allocation10 + $0xb0] sm:$0xff]
    %v2253 = vld [vmem:[#allocation10 + $0xb8] sm:$0xff]
    %v2254 = vld [vmem:[#allocation10 + $0xc0] sm:$0xff]
    %v2255 = vld [vmem:[#allocation10 + $0xc8] sm:$0xff]
    %v2256 = vld [vmem:[#allocation10 + $0xd0] sm:$0xff]
    %v2257 = vld [vmem:[#allocation10 + $0xd8] sm:$0xff]
    %v2258 = vld [vmem:[#allocation10 + $0xe0] sm:$0xff]
    %v2259 = vld [vmem:[#allocation10 + $0xe8] sm:$0xff]
    %v2260 = vld [vmem:[#allocation10 + $0xf0] sm:$0xff]
    %v2261 = vld [vmem:[#allocation10 + $0xf8] sm:$0xff]
    %v2262 = vld [vmem:[#allocation10 + $0x100] sm:$0xff]
    %v2263 = vld [vmem:[#allocation10 + $0x108] sm:$0xff]
    %v2264 = vld [vmem:[#allocation10 + $0x110] sm:$0xff]
    %v2265 = vld [vmem:[#allocation10 + $0x118] sm:$0xff]
    %v2266 = vld [vmem:[#allocation10 + $0x120] sm:$0xff]
    %v2267 = vld [vmem:[#allocation10 + $0x128] sm:$0xff]
    %v2268 = vld [vmem:[#allocation10 + $0x130] sm:$0xff]
    %v2269 = vld [vmem:[#allocation10 + $0x138] sm:$0xff]
    %v2270 = vld [vmem:[#allocation10 + $0x140] sm:$0xff]
    %v2271 = vld [vmem:[#allocation10 + $0x148] sm:$0xff]
    %v2272 = vld [vmem:[#allocation10 + $0x150] sm:$0xff]
    %v2273 = vld [vmem:[#allocation10 + $0x158] sm:$0xff]
    %v2274 = vld [vmem:[#allocation10 + $0x160] sm:$0xff]
    %v2275 = vld [vmem:[#allocation10 + $0x168] sm:$0xff]
    %v2276 = vld [vmem:[#allocation10 + $0x170] sm:$0xff]
    %v2277 = vld [vmem:[#allocation10 + $0x178] sm:$0xff]
    %v2278 = vld [vmem:[#allocation10 + $0x180] sm:$0xff]
    %v2279 = vld [vmem:[#allocation10 + $0x188] sm:$0xff]
    %v2280 = vld [vmem:[#allocation10 + $0x190] sm:$0xff]
    %v2281 = vld [vmem:[#allocation10 + $0x198] sm:$0xff]
    %v2282 = vld [vmem:[#allocation10 + $0x1a0] sm:$0xff]
    %v2283 = vld [vmem:[#allocation10 + $0x1a8] sm:$0xff]
    %v2284 = vld [vmem:[#allocation10 + $0x1b0] sm:$0xff]
    %v2285 = vld [vmem:[#allocation10 + $0x1b8] sm:$0xff]
    %v2286 = vld [vmem:[#allocation10 + $0x1c0] sm:$0xff]
    %v2287 = vld [vmem:[#allocation10 + $0x1c8] sm:$0xff]
    %v2288 = vld [vmem:[#allocation10 + $0x1d0] sm:$0xff]
    %v2289 = vld [vmem:[#allocation10 + $0x1d8] sm:$0xff]
    %v2290 = vld [vmem:[#allocation10 + $0x1e0] sm:$0xff]
    %v2291 = vld [vmem:[#allocation10 + $0x1e8] sm:$0xff]
    %v2292 = vld [vmem:[#allocation10 + $0x1f0] sm:$0xff]
    %v2293 = vld [vmem:[#allocation10 + $0x1f8] sm:$0xff]
    %v2294 = vld [vmem:[%s7] sm:$0x1]
    %v2296 = vlaneseq
    %v2297 = vshrl.u32 %v2296, 7
    %v2298 = vsub.s32 0, %v2297
    %v2299 = vrot.slane %v2294, %v2298
    %2301 = vmatprep.subr.mxu0 0.0
    %2302 = vmatpush1.msra.mxu0 %v2230
    %2303 = vmatprep.subr.mxu0 0.0
    %2304 = vmatpush1.msra.mxu0 %v2231
    %2305 = vmatprep.subr.mxu0 0.0
    %2306 = vmatpush1.msra.mxu0 %v2232
    %2307 = vmatprep.subr.mxu0 0.0
    %2308 = vmatpush1.msra.mxu0 %v2233
    %2309 = vmatprep.subr.mxu0 0.0
    %2310 = vmatpush1.msra.mxu0 %v2234
    %2311 = vmatprep.subr.mxu0 0.0
    %2312 = vmatpush1.msra.mxu0 %v2235
    %2313 = vmatprep.subr.mxu0 0.0
    %2314 = vmatpush1.msra.mxu0 %v2236
    %2315 = vmatprep.subr.mxu0 0.0
    %2316 = vmatpush1.msra.mxu0 %v2237
    %2317 = vmatprep.subr.mxu0 0.0
    %2318 = vmatpush1.msra.mxu0 %v2238
    %2319 = vmatprep.subr.mxu0 0.0
    %2320 = vmatpush1.msra.mxu0 %v2239
    %2321 = vmatprep.subr.mxu0 0.0
    %2322 = vmatpush1.msra.mxu0 %v2240
    %2323 = vmatprep.subr.mxu0 0.0
    %2324 = vmatpush1.msra.mxu0 %v2241
    %2325 = vmatprep.subr.mxu0 0.0
    %2326 = vmatpush1.msra.mxu0 %v2242
    %2327 = vmatprep.subr.mxu0 0.0
    %2328 = vmatpush1.msra.mxu0 %v2243
    %2329 = vmatprep.subr.mxu0 0.0
    %2330 = vmatpush1.msra.mxu0 %v2244
    %2331 = vmatprep.subr.mxu0 0.0
    %2332 = vmatpush1.msra.mxu0 %v2245
    %2333 = vmatprep.subr.mxu0 0.0
    %2334 = vmatpush1.msra.mxu0 %v2246
    %2335 = vmatprep.subr.mxu0 0.0
    %2336 = vmatpush1.msra.mxu0 %v2247
    %2337 = vmatprep.subr.mxu0 0.0
    %2338 = vmatpush1.msra.mxu0 %v2248
    %2339 = vmatprep.subr.mxu0 0.0
    %2340 = vmatpush1.msra.mxu0 %v2249
    %2341 = vmatprep.subr.mxu0 0.0
    %2342 = vmatpush1.msra.mxu0 %v2250
    %2343 = vmatprep.subr.mxu0 0.0
    %2344 = vmatpush1.msra.mxu0 %v2251
    %2345 = vmatprep.subr.mxu0 0.0
    %2346 = vmatpush1.msra.mxu0 %v2252
    %2347 = vmatprep.subr.mxu0 0.0
    %2348 = vmatpush1.msra.mxu0 %v2253
    %2349 = vmatprep.subr.mxu0 0.0
    %2350 = vmatpush1.msra.mxu0 %v2254
    %2351 = vmatprep.subr.mxu0 0.0
    %2352 = vmatpush1.msra.mxu0 %v2255
    %2353 = vmatprep.subr.mxu0 0.0
    %2354 = vmatpush1.msra.mxu0 %v2256
    %2355 = vmatprep.subr.mxu0 0.0
    %2356 = vmatpush1.msra.mxu0 %v2257
    %2357 = vmatprep.subr.mxu0 0.0
    %2358 = vmatpush1.msra.mxu0 %v2258
    %2359 = vmatprep.subr.mxu0 0.0
    %2360 = vmatpush1.msra.mxu0 %v2259
    %2361 = vmatprep.subr.mxu0 0.0
    %2362 = vmatpush1.msra.mxu0 %v2260
    %2363 = vmatprep.subr.mxu0 0.0
    %2364 = vmatpush1.msra.mxu0 %v2261
    %2365 = vmatprep.mubr.f32.mxu0 %v2199
    %2366 = vmatmul.mubr.f32.gmra.mrb[0].mxu0 %v2198
    %v2367 = vpop.f32.mrb[0].mxu0
    %v2368 = vadd.f32 %v2299, %v2367
    %v2369 = vpop.f32.mrb[0].mxu0
    %2370 = vmatprep.mubr.f32.mxu0 %v2203
    %2371 = vmatmul.mubr.f32.gmra.mrb[0].mxu0 %v2202
    %v2372 = vpop.f32.mrb[0].mxu0
    %v2373 = vadd.f32 %v2299, %v2372
    %v2374 = vpop.f32.mrb[0].mxu0
    %2375 = vmatprep.mubr.f32.mxu0 %v2207
    %2376 = vmatmul.mubr.f32.gmra.mrb[0].mxu0 %v2206
    %v2377 = vpop.f32.mrb[0].mxu0
    %v2378 = vadd.f32 %v2299, %v2377
    %v2379 = vpop.f32.mrb[0].mxu0
    %2380 = vmatprep.mubr.f32.mxu0 %v2211
    %2381 = vmatmul.mubr.f32.gmra.mrb[0].mxu0 %v2210
    %v2382 = vpop.f32.mrb[0].mxu0
    %v2383 = vadd.f32 %v2299, %v2382
    %v2384 = vpop.f32.mrb[0].mxu0
    %2385 = vmatprep.mubr.f32.mxu0 %v2215
    %2386 = vmatmul.mubr.f32.gmra.mrb[0].mxu0 %v2214
    %v2387 = vpop.f32.mrb[0].mxu0
    %v2388 = vadd.f32 %v2299, %v2387
    %v2389 = vpop.f32.mrb[0].mxu0
    %2390 = vmatprep.mubr.f32.mxu0 %v2219
    %2391 = vmatmul.mubr.f32.gmra.mrb[0].mxu0 %v2218
    %v2392 = vpop.f32.mrb[0].mxu0
    %v2393 = vadd.f32 %v2299, %v2392
    %v2394 = vpop.f32.mrb[0].mxu0
    %2395 = vmatprep.mubr.f32.mxu0 %v2223
    %2396 = vmatmul.mubr.f32.gmra.mrb[0].mxu0 %v2222
    %v2397 = vpop.f32.mrb[0].mxu0
    %v2398 = vadd.f32 %v2299, %v2397
    %v2399 = vpop.f32.mrb[0].mxu0
    %2400 = vmatprep.mubr.f32.mxu0 %v2227
    %2401 = vmatmul.mubr.f32.gmra.mrb[0].mxu0 %v2226
    %v2402 = vpop.f32.mrb[0].mxu0
    %v2403 = vadd.f32 %v2299, %v2402
    %v2404 = vpop.f32.mrb[0].mxu0
    %2405 = vdwg.mxu0
    %2406 = vmatprep.subr.mxu0 0.0
    %2407 = vmatpush1.msra.mxu0 %v2262
    %2408 = vmatprep.subr.mxu0 0.0
    %2409 = vmatpush1.msra.mxu0 %v2263
    %2410 = vmatprep.subr.mxu0 0.0
    %2411 = vmatpush1.msra.mxu0 %v2264
    %2412 = vmatprep.subr.mxu0 0.0
    %2413 = vmatpush1.msra.mxu0 %v2265
    %2414 = vmatprep.subr.mxu0 0.0
    %2415 = vmatpush1.msra.mxu0 %v2266
    %2416 = vmatprep.subr.mxu0 0.0
    %2417 = vmatpush1.msra.mxu0 %v2267
    %2418 = vmatprep.subr.mxu0 0.0
    %2419 = vmatpush1.msra.mxu0 %v2268
    %2420 = vmatprep.subr.mxu0 0.0
    %2421 = vmatpush1.msra.mxu0 %v2269
    %2422 = vmatprep.subr.mxu0 0.0
    %2423 = vmatpush1.msra.mxu0 %v2270
    %2424 = vmatprep.subr.mxu0 0.0
    %2425 = vmatpush1.msra.mxu0 %v2271
    %2426 = vmatprep.subr.mxu0 0.0
    %2427 = vmatpush1.msra.mxu0 %v2272
    %2428 = vmatprep.subr.mxu0 0.0
    %2429 = vmatpush1.msra.mxu0 %v2273
    %2430 = vmatprep.subr.mxu0 0.0
    %2431 = vmatpush1.msra.mxu0 %v2274
    %2432 = vmatprep.subr.mxu0 0.0
    %2433 = vmatpush1.msra.mxu0 %v2275
    %2434 = vmatprep.subr.mxu0 0.0
    %2435 = vmatpush1.msra.mxu0 %v2276
    %2436 = vmatprep.subr.mxu0 0.0
    %2437 = vmatpush1.msra.mxu0 %v2277
    %2438 = vmatprep.subr.mxu0 0.0
    %2439 = vmatpush1.msra.mxu0 %v2278
    %2440 = vmatprep.subr.mxu0 0.0
    %2441 = vmatpush1.msra.mxu0 %v2279
    %2442 = vmatprep.subr.mxu0 0.0
    %2443 = vmatpush1.msra.mxu0 %v2280
    %2444 = vmatprep.subr.mxu0 0.0
    %2445 = vmatpush1.msra.mxu0 %v2281
    %2446 = vmatprep.subr.mxu0 0.0
    %2447 = vmatpush1.msra.mxu0 %v2282
    %2448 = vmatprep.subr.mxu0 0.0
    %2449 = vmatpush1.msra.mxu0 %v2283
    %2450 = vmatprep.subr.mxu0 0.0
    %2451 = vmatpush1.msra.mxu0 %v2284
    %2452 = vmatprep.subr.mxu0 0.0
    %2453 = vmatpush1.msra.mxu0 %v2285
    %2454 = vmatprep.subr.mxu0 0.0
    %2455 = vmatpush1.msra.mxu0 %v2286
    %2456 = vmatprep.subr.mxu0 0.0
    %2457 = vmatpush1.msra.mxu0 %v2287
    %2458 = vmatprep.subr.mxu0 0.0
    %2459 = vmatpush1.msra.mxu0 %v2288
    %2460 = vmatprep.subr.mxu0 0.0
    %2461 = vmatpush1.msra.mxu0 %v2289
    %2462 = vmatprep.subr.mxu0 0.0
    %2463 = vmatpush1.msra.mxu0 %v2290
    %2464 = vmatprep.subr.mxu0 0.0
    %2465 = vmatpush1.msra.mxu0 %v2291
    %2466 = vmatprep.subr.mxu0 0.0
    %2467 = vmatpush1.msra.mxu0 %v2292
    %2468 = vmatprep.subr.mxu0 0.0
    %2469 = vmatpush1.msra.mxu0 %v2293
    %2470 = vmatprep.mubr.f32.mxu0 %v2201
    %2471 = vmatmul.mubr.f32.gmra.mrb[0].mxu0 %v2200
    %v2472 = vpop.f32.mrb[0].mxu0
    %v2473 = vadd.f32 %v2368, %v2472
    %v2474 = vpop.f32.mrb[0].mxu0
    %2475 = vmatprep.mubr.f32.mxu0 %v2205
    %2476 = vmatmul.mubr.f32.gmra.mrb[0].mxu0 %v2204
    %v2477 = vpop.f32.mrb[0].mxu0
    %v2478 = vadd.f32 %v2373, %v2477
    %v2479 = vpop.f32.mrb[0].mxu0
    %2480 = vmatprep.mubr.f32.mxu0 %v2209
    %2481 = vmatmul.mubr.f32.gmra.mrb[0].mxu0 %v2208
    %v2482 = vpop.f32.mrb[0].mxu0
    %v2483 = vadd.f32 %v2378, %v2482
    %v2484 = vpop.f32.mrb[0].mxu0
    %2485 = vmatprep.mubr.f32.mxu0 %v2213
    %2486 = vmatmul.mubr.f32.gmra.mrb[0].mxu0 %v2212
    %v2487 = vpop.f32.mrb[0].mxu0
    %v2488 = vadd.f32 %v2383, %v2487
    %v2489 = vpop.f32.mrb[0].mxu0
    %2490 = vmatprep.mubr.f32.mxu0 %v2217
    %2491 = vmatmul.mubr.f32.gmra.mrb[0].mxu0 %v2216
    %v2492 = vpop.f32.mrb[0].mxu0
    %v2493 = vadd.f32 %v2388, %v2492
    %v2494 = vpop.f32.mrb[0].mxu0
    %2495 = vmatprep.mubr.f32.mxu0 %v2221
    %2496 = vmatmul.mubr.f32.gmra.mrb[0].mxu0 %v2220
    %v2497 = vpop.f32.mrb[0].mxu0
    %v2498 = vadd.f32 %v2393, %v2497
    %v2499 = vpop.f32.mrb[0].mxu0
    %2500 = vmatprep.mubr.f32.mxu0 %v2225
    %2501 = vmatmul.mubr.f32.gmra.mrb[0].mxu0 %v2224
    %v2502 = vpop.f32.mrb[0].mxu0
    %v2503 = vadd.f32 %v2398, %v2502
    %v2504 = vpop.f32.mrb[0].mxu0
    %2505 = vmatprep.mubr.f32.mxu0 %v2229
    %2506 = vmatmul.mubr.f32.gmra.mrb[0].mxu0 %v2228
    %v2507 = vpop.f32.mrb[0].mxu0
    %v2508 = vadd.f32 %v2403, %v2507
    %v2509 = vpop.f32.mrb[0].mxu0
    %2510 = vdwg.mxu0
    %2511 = vst [vmem:[#allocation11] sm:$0xff] %v2473
    %2512 = vst [vmem:[#allocation11 + $0x8] sm:$0xff] %v2478
    %2513 = vst [vmem:[#allocation11 + $0x10] sm:$0xff] %v2483
    %2514 = vst [vmem:[#allocation11 + $0x18] sm:$0xff] %v2488
    %2515 = vst [vmem:[#allocation11 + $0x20] sm:$0xff] %v2493
    %2516 = vst [vmem:[#allocation11 + $0x28] sm:$0xff] %v2498
    %2517 = vst [vmem:[#allocation11 + $0x30] sm:$0xff] %v2503
    %2518 = vst [vmem:[#allocation11 + $0x38] sm:$0xff] %v2508
    // Predicated region
    $region54: #{tpu_custom_call.1} parent=1 // pred_check
      _
    $region55: #{tpu_custom_call.1} parent=1 // pred_check_branch
      %2520 = sbr.rel (0) target = $region57
    $region56: #{tpu_custom_call.1} parent=1 // pred_region
      %s2522 = ssub.s32 1024, 1024
      %2523 = vsyncadd [#allocation4], %s2522
      %s2524 = sshll.u32 [#allocation11], 4
      %s2525 = int_to_ptr.vmem [resolvable:$true] %s2524
      %2530 = dma.vmem_to_hbm [thread:$0]  %s2525, 1024, %s8, [#allocation4], 128, 128, 8
    $region57: #{tpu_custom_call.1} parent=1 // pred_fallthru
      _
    // Predicated region
    $region58: #{tpu_custom_call.1} parent=1 // pred_check
      _
    $region59: #{tpu_custom_call.1} parent=1 // pred_check_branch
      %2532 = sbr.rel (0) target = $region61
    $region60: #{tpu_custom_call.1} parent=1 // pred_region
      %2533 = dma.done [#allocation4], 1024
    $region61: #{tpu_custom_call.1} parent=1 // pred_fallthru
      _
    %2534 = vsyncpa [#allocation3], 1
    %2535 = vsyncpa [#allocation6], 1
    %2536 = vsyncpa [#allocation9], 1
    %2537 = vsyncpa [#allocation4], 1

</llo_original>
